<compile_context>
chip_gen: v6e
topology: v6e:2x2x1
jax: 0.10.0
libtpu: 0.0.40
codegen_flags: <defaults>
</compile_context>

<pallas_src>
import functools

import jax
import jax.numpy as jnp
from jax import lax
from jax.experimental import pallas as pl
from jax.experimental.pallas import tpu as pltpu

_VMEM = pl.BlockSpec(memory_space=pltpu.MemorySpace.VMEM)


# ---------------------------------------------------------------------------
# Fused forward kernel
# ---------------------------------------------------------------------------
def _magnn_fused_kernel(
    xN_ref, x1_ref, x2_ref,
    s1_src_r, s1_src_c, s1_dst_r, s1_dst_c,
    s2_src_r, s2_src_c, s2_dst_r, s2_dst_c,
    e12_src_c, e12_dst_r,
    w1_ref, w2_ref,
    w1row_ref, w2row_ref, w3row_ref, bblk_ref, attblk_ref,
    out_ref,
    *, D, mxu_dtype):
  f32 = jnp.float32
  N0, N1, N2 = xN_ref.shape[0], x1_ref.shape[0], x2_ref.shape[0]
  E1, E2, E12 = s1_src_r.shape[1], s2_src_r.shape[1], e12_dst_r.shape[1]

  # lane mask selecting the D feature lanes; lane D carries the per-row "1"
  # whose scatter-sum gives the segment count for free on the MXU.
  feat = lax.broadcasted_iota(jnp.int32, (1, D + 1), 1) < D

  def mm(a, b):
    # MXU matmul with f32 accumulation.  mxu_dtype=bf16 halves operand bytes
    # and doubles MXU rate at scale; counts stay exact (accumulation is f32).
    return jnp.dot(a.astype(mxu_dtype), b.astype(mxu_dtype),
                   preferred_element_type=f32)

  def scatter_oh(idx_row, T, E):
    # (T, E) one-hot of destination index per edge (scatter matrix).
    return (lax.broadcasted_iota(jnp.int32, (T, E), 0)
            == idx_row[...]).astype(mxu_dtype)

  def gather_oh(idx_col, E, N):
    # (E, N) one-hot of source index per edge (gather matrix).
    return (lax.broadcasted_iota(jnp.int32, (E, N), 1)
            == idx_col[...]).astype(mxu_dtype)

  def seg_mean_ext(A, vals_ext):
    # One MXU matmul yields both weighted sums (lanes :D) and counts (lane D).
    S = mm(A, vals_ext)                          # (T, D+1)
    cnt = jnp.maximum(S[:, D:D + 1], 1.0)        # empty targets -> mean 0
    return S / cnt                               # (T, D+1)

  def edge_weight(vals_ext, w_col):
    # Scale feature lanes by the per-edge weight; count lane stays 1.
    return jnp.where(feat, vals_ext * w_col, vals_ext)

  def mix(mean_ext, x_ext):
    # (msg + x) / 2 on feature lanes; re-pin the carried count lane to 1.0.
    return jnp.where(feat, (mean_ext + x_ext) * 0.5, 1.0)

  xN, x1, x2 = xN_ref[...], x1_ref[...], x2_ref[...]
  w1, w2 = w1_ref[...], w2_ref[...]

  # --- metapath s-1-s ------------------------------------------------------
  g = edge_weight(mm(gather_oh(s1_src_c, E1, N0), xN), w1)        # gather+weight
  net1 = mix(seg_mean_ext(scatter_oh(s1_dst_r, N1, E1), g), x1)   # (N1, D+1)
  s1s = seg_mean_ext(scatter_oh(s1_src_r, N0, E1),
                     mm(gather_oh(s1_dst_c, E1, N1), net1))       # (N0, D+1)

  # --- metapath s-2-s ------------------------------------------------------
  g = edge_weight(mm(gather_oh(s2_src_c, E2, N0), xN), w2)
  net2 = mix(seg_mean_ext(scatter_oh(s2_dst_r, N2, E2), g), x2)   # (N2, D+1)
  A_src2 = scatter_oh(s2_src_r, N0, E2)
  G_dst2 = gather_oh(s2_dst_c, E2, N2)
  s2s = seg_mean_ext(A_src2, mm(G_dst2, net2))                    # (N0, D+1)

  # --- metapath s-1-2-s  (msg_1_s12s == msg_1, so net1 is reused) ----------
  g = mm(gather_oh(e12_src_c, E12, N1), net1)
  net2b = mix(seg_mean_ext(scatter_oh(e12_dst_r, N2, E12), g), x2)
  s12s = seg_mean_ext(A_src2, edge_weight(mm(G_dst2, net2b), w2))  # (N0, D+1)

  # --- head: block-diagonal Linear+ReLU into a lane-dense (N0, 3D) slab ----
  # Three block-row matmuls accumulate into the same 96-lane slab (equivalent
  # to the single (3D,3D) block-diagonal matmul, minus the zero blocks); the
  # carried count lane is killed by a zero weight row.
  H = jnp.maximum(mm(s1s, w1row_ref[...]) + mm(s2s, w2row_ref[...])
                  + mm(s12s, w3row_ref[...]) + bblk_ref[...], 0.0)  # (N0, 3D)
  scores = mm(H, attblk_ref[...])                                   # (N0, 3), MXU
  sc1, sc2, sc3 = scores[:, 0:1], scores[:, 1:2], scores[:, 2:3]
  m = jnp.maximum(jnp.maximum(sc1, sc2), sc3)
  e1, e2, e3 = jnp.exp(sc1 - m), jnp.exp(sc2 - m), jnp.exp(sc3 - m)
  inv = pl.reciprocal(e1 + e2 + e3)                                 # EUP
  out_ref[...] = (e1 * H[:, 0:D] + e2 * H[:, D:2 * D]
                  + e3 * H[:, 2 * D:3 * D]) * inv


# ---------------------------------------------------------------------------
# Host wrapper: packs indices / weights / block-diagonal head params and
# launches the single fused kernel.
# ---------------------------------------------------------------------------
def magnn_agg_forward(params, x_list, edge_index_list, x_node,
                      edge_weight_list, edge_index_12, *,
                      mxu_dtype=jnp.float32):
  f32 = jnp.float32
  D = x_node.shape[1]
  e_s1 = edge_index_list[1].astype(jnp.int32)
  e_s2 = edge_index_list[2].astype(jnp.int32)
  e_12 = edge_index_12.astype(jnp.int32)
  if edge_weight_list[0] is None:
    edge_weight_list = [jnp.ones((ei.shape[1],), f32) for ei in edge_index_list]

  N0, N1, N2 = x_node.shape[0], x_list[1].shape[0], x_list[2].shape[0]
  E1, E2, E12 = e_s1.shape[1], e_s2.shape[1], e_12.shape[1]

  # Append the carried "ones" column on the host (counts ride the MXU for free).
  def ones_col(x):
    return jnp.concatenate([x.astype(f32), jnp.ones((x.shape[0], 1), f32)], axis=1)

  xN_ext, x1_ext, x2_ext = ones_col(x_node), ones_col(x_list[1]), ones_col(x_list[2])

  w1 = edge_weight_list[1].astype(f32).reshape(E1, 1)
  w2 = edge_weight_list[2].astype(f32).reshape(E2, 1)

  # Block-row pieces of the block-diagonal head weight (extra zero row kills
  # the carried count lane), concatenated bias and block-diagonal att matrix.
  w1row = jnp.zeros((D + 1, 3 * D), f32).at[0:D, 0:D].set(params["w1"].T.astype(f32))
  w2row = jnp.zeros((D + 1, 3 * D), f32).at[0:D, D:2 * D].set(params["w2"].T.astype(f32))
  w3row = jnp.zeros((D + 1, 3 * D), f32).at[0:D, 2 * D:3 * D].set(params["w3"].T.astype(f32))
  bblk = jnp.concatenate([params["b1"], params["b2"], params["b3"]]
                         ).astype(f32).reshape(1, 3 * D)
  attblk = jnp.zeros((3 * D, 3), f32)
  attblk = attblk.at[0:D, 0].set(params["att"][0].astype(f32))
  attblk = attblk.at[D:2 * D, 1].set(params["att"][1].astype(f32))
  attblk = attblk.at[2 * D:3 * D, 2].set(params["att"][2].astype(f32))

  row = lambda v: v.reshape(1, -1).astype(jnp.int32)
  col = lambda v: v.reshape(-1, 1).astype(jnp.int32)

  inputs = (
      xN_ext, x1_ext, x2_ext,
      row(e_s1[0]), col(e_s1[0]), row(e_s1[1]), col(e_s1[1]),
      row(e_s2[0]), col(e_s2[0]), row(e_s2[1]), col(e_s2[1]),
      col(e_12[0]), row(e_12[1]),
      w1, w2,
      w1row, w2row, w3row, bblk, attblk,
  )

  # Advisory cost estimate for XLA's scheduler.
  Dp = D + 1
  mm_dims = [
      (E1, N0, Dp), (N1, E1, Dp), (E1, N1, Dp), (N0, E1, Dp),      # s-1-s
      (E2, N0, Dp), (N2, E2, Dp), (E2, N2, Dp), (N0, E2, Dp),      # s-2-s
      (E12, N1, Dp), (N2, E12, Dp), (E2, N2, Dp), (N0, E2, Dp),    # s-1-2-s
      (N0, Dp, 3 * D), (N0, Dp, 3 * D), (N0, Dp, 3 * D),           # head fc
      (N0, 3 * D, 3),                                              # att scores
  ]
  flops = 2 * sum(m * k * n for m, k, n in mm_dims)
  bytes_accessed = sum(int(a.size) * a.dtype.itemsize for a in inputs) + N0 * D * 4
  cost = pl.CostEstimate(flops=flops, transcendentals=4 * N0,
                         bytes_accessed=bytes_accessed)

  kernel = functools.partial(_magnn_fused_kernel, D=D, mxu_dtype=mxu_dtype)
  return pl.pallas_call(
      kernel,
      out_shape=jax.ShapeDtypeStruct((N0, D), f32),
      in_specs=[_VMEM] * len(inputs),
      out_specs=_VMEM,
      cost_estimate=cost,
  )(*inputs)


# ---------------------------------------------------------------------------
# Pure-JAX reference (for correctness check)
# ---------------------------------------------------------------------------
def _ref_scatter_mean(vals, w, idx, dim_size):
  vals = vals * w[:, None]
  sums = jnp.zeros((dim_size, vals.shape[1]), jnp.float32).at[idx].add(vals)
  cnt = jnp.zeros((dim_size,), jnp.float32).at[idx].add(1.0)
  return sums / jnp.maximum(cnt, 1.0)[:, None]


def magnn_agg_reference(params, x_list, edge_index_list, x_node,
                        edge_weight_list, edge_index_12):
  e_s1 = edge_index_list[1]
  e_s2 = edge_index_list[2]
  w1e = edge_weight_list[1].astype(jnp.float32)
  w2e = edge_weight_list[2].astype(jnp.float32)
  N0, N1, N2 = x_node.shape[0], x_list[1].shape[0], x_list[2].shape[0]
  ones = lambda n: jnp.ones((n,), jnp.float32)

  msg_1 = _ref_scatter_mean(x_node[e_s1[0]], w1e, e_s1[1], N1)
  net_msg1 = (msg_1 + x_list[1]) / 2.0
  s1s = _ref_scatter_mean(net_msg1[e_s1[1]], ones(e_s1.shape[1]), e_s1[0], N0)
  h1 = jax.nn.relu(s1s @ params["w1"].T + params["b1"])

  msg_2 = _ref_scatter_mean(x_node[e_s2[0]], w2e, e_s2[1], N2)
  net_msg2 = (msg_2 + x_list[2]) / 2.0
  s2s = _ref_scatter_mean(net_msg2[e_s2[1]], ones(e_s2.shape[1]), e_s2[0], N0)
  h2 = jax.nn.relu(s2s @ params["w2"].T + params["b2"])

  msg_2_12 = _ref_scatter_mean(net_msg1[edge_index_12[0]],
                               ones(edge_index_12.shape[1]), edge_index_12[1], N2)
  net_msg2_12 = (msg_2_12 + x_list[2]) / 2.0
  s12s = _ref_scatter_mean(net_msg2_12[e_s2[1]], w2e, e_s2[0], N0)
  h3 = jax.nn.relu(s12s @ params["w3"].T + params["b3"])

  allm = jnp.stack([h1, h2, h3], axis=1)                      # (N0, 3, D)
  scores = (allm * params["att"][None]).sum(-1)               # (N0, 3)
  w = jax.nn.softmax(scores, axis=1)[..., None]
  return (allm * w).sum(1)


# ---------------------------------------------------------------------------
if __name__ == "__main__":
  key = jax.random.PRNGKey(0)
  D = 32          # embed_dim
  N0, N1, N2 = 16, 12, 10
  E0, E1, E2, E12 = 8, 24, 20, 18

  ks = jax.random.split(key, 16)

  # --- parameters (deterministic init, shapes from __init__) ---
  limit = 1.0 / jnp.sqrt(jnp.float32(D))
  xavier = jnp.sqrt(6.0 / (D + 3))
  params = {
      "w1": jax.random.uniform(ks[0], (D, D), jnp.float32, -limit, limit),
      "b1": jax.random.uniform(ks[1], (D,), jnp.float32, -limit, limit),
      "w2": jax.random.uniform(ks[2], (D, D), jnp.float32, -limit, limit),
      "b2": jax.random.uniform(ks[3], (D,), jnp.float32, -limit, limit),
      "w3": jax.random.uniform(ks[4], (D, D), jnp.float32, -limit, limit),
      "b3": jax.random.uniform(ks[5], (D,), jnp.float32, -limit, limit),
      "att": jax.random.uniform(ks[6], (3, D), jnp.float32, -xavier, xavier),
  }

  # --- inputs ---
  x_node = jax.random.normal(ks[7], (N0, D), jnp.float32)
  x_list = [
      x_node,
      jax.random.normal(ks[8], (N1, D), jnp.float32),
      jax.random.normal(ks[9], (N2, D), jnp.float32),
  ]
  e0 = jnp.stack([jax.random.randint(ks[10], (E0,), 0, N0),
                  jax.random.randint(ks[10], (E0,), 0, N0)]).astype(jnp.int32)
  e_s1 = jnp.stack([jax.random.randint(ks[11], (E1,), 0, N0),
                    jax.random.randint(ks[12], (E1,), 0, N1)]).astype(jnp.int32)
  e_s2 = jnp.stack([jax.random.randint(ks[13], (E2,), 0, N0),
                    jax.random.randint(ks[14], (E2,), 0, N2)]).astype(jnp.int32)
  edge_index_list = [e0, e_s1, e_s2]
  edge_index_12 = jnp.stack(
      [jax.random.randint(ks[15], (E12,), 0, N1),
       jax.random.randint(jax.random.fold_in(key, 99), (E12,), 0, N2)]
  ).astype(jnp.int32)
  edge_weight_list = [
      jnp.ones((E0,), jnp.float32),
      jax.random.uniform(jax.random.fold_in(key, 1), (E1,), jnp.float32, 0.5, 1.5),
      jax.random.uniform(jax.random.fold_in(key, 2), (E2,), jnp.float32, 0.5, 1.5),
  ]

  ref = magnn_agg_reference(params, x_list, edge_index_list, x_node,
                            edge_weight_list, edge_index_12)
  ref = jax.block_until_ready(ref)

  # f32 MXU operands: bit-faithful validation against the reference.
  out = magnn_agg_forward(params, x_list, edge_index_list, x_node,
                          edge_weight_list, edge_index_12)
  out = jax.block_until_ready(out)
  assert out.shape == (N0, D)
  assert jnp.allclose(out, ref, atol=5e-4, rtol=5e-4), "mismatch vs reference (f32)"

  # bf16 MXU-operand / f32-accumulate path (2x MXU rate, half the operand
  # bytes at scale); validated with a correspondingly looser tolerance.
  out_bf16 = magnn_agg_forward(params, x_list, edge_index_list, x_node,
                               edge_weight_list, edge_index_12,
                               mxu_dtype=jnp.bfloat16)
  out_bf16 = jax.block_until_ready(out_bf16)
  assert jnp.allclose(out_bf16, ref, atol=1e-1, rtol=1e-1), "mismatch vs reference (bf16)"

  print("KERNEL_OK")
</pallas_src>

<mosaic_0001>
module attributes {stable_mosaic.version = 11 : i64} {
  func.func @_magnn_fused_kernel(%arg0: memref<16x33xf32, #tpu.memory_space<vmem>>, %arg1: memref<12x33xf32, #tpu.memory_space<vmem>>, %arg2: memref<10x33xf32, #tpu.memory_space<vmem>>, %arg3: memref<1x24xi32, #tpu.memory_space<vmem>>, %arg4: memref<24x1xi32, #tpu.memory_space<vmem>>, %arg5: memref<1x24xi32, #tpu.memory_space<vmem>>, %arg6: memref<24x1xi32, #tpu.memory_space<vmem>>, %arg7: memref<1x20xi32, #tpu.memory_space<vmem>>, %arg8: memref<20x1xi32, #tpu.memory_space<vmem>>, %arg9: memref<1x20xi32, #tpu.memory_space<vmem>>, %arg10: memref<20x1xi32, #tpu.memory_space<vmem>>, %arg11: memref<18x1xi32, #tpu.memory_space<vmem>>, %arg12: memref<1x18xi32, #tpu.memory_space<vmem>>, %arg13: memref<24x1xf32, #tpu.memory_space<vmem>>, %arg14: memref<20x1xf32, #tpu.memory_space<vmem>>, %arg15: memref<33x96xf32, #tpu.memory_space<vmem>>, %arg16: memref<33x96xf32, #tpu.memory_space<vmem>>, %arg17: memref<33x96xf32, #tpu.memory_space<vmem>>, %arg18: memref<1x96xf32, #tpu.memory_space<vmem>>, %arg19: memref<96x3xf32, #tpu.memory_space<vmem>>, %arg20: memref<16x32xf32, #tpu.memory_space<vmem>>) attributes {dimension_semantics = [], scalar_prefetch = 0 : i64, scratch_operands = 0 : i64, tpu.core_type = #tpu.core_type<tc>} {
    %0 = tpu.iota {dimensions = array<i32: 1>} : vector<1x33xi32>
    %c32_i32 = arith.constant 32 : i32
    %1 = vector.broadcast %c32_i32 : i32 to vector<1x33xi32>
    %2 = arith.cmpi slt, %0, %1 : vector<1x33xi32>
    %c0 = arith.constant 0 : index
    %c0_0 = arith.constant 0 : index
    %3 = vector.load %arg0[%c0, %c0_0] : memref<16x33xf32, #tpu.memory_space<vmem>>, vector<16x33xf32>
    %c0_1 = arith.constant 0 : index
    %c0_2 = arith.constant 0 : index
    %4 = vector.load %arg1[%c0_1, %c0_2] : memref<12x33xf32, #tpu.memory_space<vmem>>, vector<12x33xf32>
    %c0_3 = arith.constant 0 : index
    %c0_4 = arith.constant 0 : index
    %5 = vector.load %arg2[%c0_3, %c0_4] : memref<10x33xf32, #tpu.memory_space<vmem>>, vector<10x33xf32>
    %c0_5 = arith.constant 0 : index
    %c0_6 = arith.constant 0 : index
    %6 = vector.load %arg13[%c0_5, %c0_6] : memref<24x1xf32, #tpu.memory_space<vmem>>, vector<24x1xf32>
    %c0_7 = arith.constant 0 : index
    %c0_8 = arith.constant 0 : index
    %7 = vector.load %arg14[%c0_7, %c0_8] : memref<20x1xf32, #tpu.memory_space<vmem>>, vector<20x1xf32>
    %8 = tpu.iota {dimensions = array<i32: 1>} : vector<24x16xi32>
    %c0_9 = arith.constant 0 : index
    %c0_10 = arith.constant 0 : index
    %9 = vector.load %arg4[%c0_9, %c0_10] : memref<24x1xi32, #tpu.memory_space<vmem>>, vector<24x1xi32>
    %10 = vector.broadcast %9 : vector<24x1xi32> to vector<24x16xi32>
    %11 = arith.cmpi eq, %8, %10 : vector<24x16xi32>
    %12 = arith.extui %11 : vector<24x16xi1> to vector<24x16xi32>
    %13 = arith.sitofp %12 : vector<24x16xi32> to vector<24x16xf32>
    %cst = arith.constant dense<0.000000e+00> : vector<24x33xf32>
    %14 = tpu.matmul %13, %3, %cst {dimension_numbers = #tpu.dot_dimension_numbers<[1], [0], [0], [1], [0, 0, 1, 1], [], []>} : vector<24x16xf32>, vector<16x33xf32>, vector<24x33xf32> -> vector<24x33xf32>
    %15 = vector.broadcast %6 : vector<24x1xf32> to vector<24x33xf32>
    %16 = arith.mulf %14, %15 : vector<24x33xf32>
    %17 = vector.shape_cast %2 : vector<1x33xi1> to vector<1x33xi1>
    %18 = vector.broadcast %17 : vector<1x33xi1> to vector<24x33xi1>
    %19 = arith.select %18, %16, %14 : vector<24x33xi1>, vector<24x33xf32>
    %20 = tpu.iota {dimensions = array<i32: 0>} : vector<12x24xi32>
    %c0_11 = arith.constant 0 : index
    %c0_12 = arith.constant 0 : index
    %21 = vector.load %arg5[%c0_11, %c0_12] : memref<1x24xi32, #tpu.memory_space<vmem>>, vector<1x24xi32>
    %22 = vector.broadcast %21 : vector<1x24xi32> to vector<12x24xi32>
    %23 = arith.cmpi eq, %20, %22 : vector<12x24xi32>
    %24 = arith.extui %23 : vector<12x24xi1> to vector<12x24xi32>
    %25 = arith.sitofp %24 : vector<12x24xi32> to vector<12x24xf32>
    %cst_13 = arith.constant dense<0.000000e+00> : vector<12x33xf32>
    %26 = tpu.matmul %25, %19, %cst_13 {dimension_numbers = #tpu.dot_dimension_numbers<[1], [0], [0], [1], [0, 0, 1, 1], [], []>} : vector<12x24xf32>, vector<24x33xf32>, vector<12x33xf32> -> vector<12x33xf32>
    %27 = vector.extract_strided_slice %26 {offsets = [0, 32], sizes = [12, 1], strides = [1, 1]} : vector<12x33xf32> to vector<12x1xf32>
    %cst_14 = arith.constant 1.000000e+00 : f32
    %28 = vector.broadcast %cst_14 : f32 to vector<12x1xf32>
    %29 = arith.maximumf %27, %28 : vector<12x1xf32>
    %30 = vector.broadcast %29 : vector<12x1xf32> to vector<12x33xf32>
    %31 = arith.divf %26, %30 : vector<12x33xf32>
    %32 = arith.addf %31, %4 : vector<12x33xf32>
    %cst_15 = arith.constant 5.000000e-01 : f32
    %33 = vector.broadcast %cst_15 : f32 to vector<12x33xf32>
    %34 = arith.mulf %32, %33 : vector<12x33xf32>
    %cst_16 = arith.constant 1.000000e+00 : f32
    %35 = vector.shape_cast %2 : vector<1x33xi1> to vector<1x33xi1>
    %36 = vector.broadcast %35 : vector<1x33xi1> to vector<12x33xi1>
    %37 = vector.broadcast %cst_16 : f32 to vector<12x33xf32>
    %38 = arith.select %36, %34, %37 : vector<12x33xi1>, vector<12x33xf32>
    %39 = tpu.iota {dimensions = array<i32: 0>} : vector<16x24xi32>
    %c0_17 = arith.constant 0 : index
    %c0_18 = arith.constant 0 : index
    %40 = vector.load %arg3[%c0_17, %c0_18] : memref<1x24xi32, #tpu.memory_space<vmem>>, vector<1x24xi32>
    %41 = vector.broadcast %40 : vector<1x24xi32> to vector<16x24xi32>
    %42 = arith.cmpi eq, %39, %41 : vector<16x24xi32>
    %43 = arith.extui %42 : vector<16x24xi1> to vector<16x24xi32>
    %44 = arith.sitofp %43 : vector<16x24xi32> to vector<16x24xf32>
    %45 = tpu.iota {dimensions = array<i32: 1>} : vector<24x12xi32>
    %c0_19 = arith.constant 0 : index
    %c0_20 = arith.constant 0 : index
    %46 = vector.load %arg6[%c0_19, %c0_20] : memref<24x1xi32, #tpu.memory_space<vmem>>, vector<24x1xi32>
    %47 = vector.broadcast %46 : vector<24x1xi32> to vector<24x12xi32>
    %48 = arith.cmpi eq, %45, %47 : vector<24x12xi32>
    %49 = arith.extui %48 : vector<24x12xi1> to vector<24x12xi32>
    %50 = arith.sitofp %49 : vector<24x12xi32> to vector<24x12xf32>
    %cst_21 = arith.constant dense<0.000000e+00> : vector<24x33xf32>
    %51 = tpu.matmul %50, %38, %cst_21 {dimension_numbers = #tpu.dot_dimension_numbers<[1], [0], [0], [1], [0, 0, 1, 1], [], []>} : vector<24x12xf32>, vector<12x33xf32>, vector<24x33xf32> -> vector<24x33xf32>
    %cst_22 = arith.constant dense<0.000000e+00> : vector<16x33xf32>
    %52 = tpu.matmul %44, %51, %cst_22 {dimension_numbers = #tpu.dot_dimension_numbers<[1], [0], [0], [1], [0, 0, 1, 1], [], []>} : vector<16x24xf32>, vector<24x33xf32>, vector<16x33xf32> -> vector<16x33xf32>
    %53 = vector.extract_strided_slice %52 {offsets = [0, 32], sizes = [16, 1], strides = [1, 1]} : vector<16x33xf32> to vector<16x1xf32>
    %cst_23 = arith.constant 1.000000e+00 : f32
    %54 = vector.broadcast %cst_23 : f32 to vector<16x1xf32>
    %55 = arith.maximumf %53, %54 : vector<16x1xf32>
    %56 = vector.broadcast %55 : vector<16x1xf32> to vector<16x33xf32>
    %57 = arith.divf %52, %56 : vector<16x33xf32>
    %58 = tpu.iota {dimensions = array<i32: 1>} : vector<20x16xi32>
    %c0_24 = arith.constant 0 : index
    %c0_25 = arith.constant 0 : index
    %59 = vector.load %arg8[%c0_24, %c0_25] : memref<20x1xi32, #tpu.memory_space<vmem>>, vector<20x1xi32>
    %60 = vector.broadcast %59 : vector<20x1xi32> to vector<20x16xi32>
    %61 = arith.cmpi eq, %58, %60 : vector<20x16xi32>
    %62 = arith.extui %61 : vector<20x16xi1> to vector<20x16xi32>
    %63 = arith.sitofp %62 : vector<20x16xi32> to vector<20x16xf32>
    %cst_26 = arith.constant dense<0.000000e+00> : vector<20x33xf32>
    %64 = tpu.matmul %63, %3, %cst_26 {dimension_numbers = #tpu.dot_dimension_numbers<[1], [0], [0], [1], [0, 0, 1, 1], [], []>} : vector<20x16xf32>, vector<16x33xf32>, vector<20x33xf32> -> vector<20x33xf32>
    %65 = vector.broadcast %7 : vector<20x1xf32> to vector<20x33xf32>
    %66 = arith.mulf %64, %65 : vector<20x33xf32>
    %67 = vector.shape_cast %2 : vector<1x33xi1> to vector<1x33xi1>
    %68 = vector.broadcast %67 : vector<1x33xi1> to vector<20x33xi1>
    %69 = arith.select %68, %66, %64 : vector<20x33xi1>, vector<20x33xf32>
    %70 = tpu.iota {dimensions = array<i32: 0>} : vector<10x20xi32>
    %c0_27 = arith.constant 0 : index
    %c0_28 = arith.constant 0 : index
    %71 = vector.load %arg9[%c0_27, %c0_28] : memref<1x20xi32, #tpu.memory_space<vmem>>, vector<1x20xi32>
    %72 = vector.broadcast %71 : vector<1x20xi32> to vector<10x20xi32>
    %73 = arith.cmpi eq, %70, %72 : vector<10x20xi32>
    %74 = arith.extui %73 : vector<10x20xi1> to vector<10x20xi32>
    %75 = arith.sitofp %74 : vector<10x20xi32> to vector<10x20xf32>
    %cst_29 = arith.constant dense<0.000000e+00> : vector<10x33xf32>
    %76 = tpu.matmul %75, %69, %cst_29 {dimension_numbers = #tpu.dot_dimension_numbers<[1], [0], [0], [1], [0, 0, 1, 1], [], []>} : vector<10x20xf32>, vector<20x33xf32>, vector<10x33xf32> -> vector<10x33xf32>
    %77 = vector.extract_strided_slice %76 {offsets = [0, 32], sizes = [10, 1], strides = [1, 1]} : vector<10x33xf32> to vector<10x1xf32>
    %cst_30 = arith.constant 1.000000e+00 : f32
    %78 = vector.broadcast %cst_30 : f32 to vector<10x1xf32>
    %79 = arith.maximumf %77, %78 : vector<10x1xf32>
    %80 = vector.broadcast %79 : vector<10x1xf32> to vector<10x33xf32>
    %81 = arith.divf %76, %80 : vector<10x33xf32>
    %82 = arith.addf %81, %5 : vector<10x33xf32>
    %cst_31 = arith.constant 5.000000e-01 : f32
    %83 = vector.broadcast %cst_31 : f32 to vector<10x33xf32>
    %84 = arith.mulf %82, %83 : vector<10x33xf32>
    %cst_32 = arith.constant 1.000000e+00 : f32
    %85 = vector.shape_cast %2 : vector<1x33xi1> to vector<1x33xi1>
    %86 = vector.broadcast %85 : vector<1x33xi1> to vector<10x33xi1>
    %87 = vector.broadcast %cst_32 : f32 to vector<10x33xf32>
    %88 = arith.select %86, %84, %87 : vector<10x33xi1>, vector<10x33xf32>
    %89 = tpu.iota {dimensions = array<i32: 0>} : vector<16x20xi32>
    %c0_33 = arith.constant 0 : index
    %c0_34 = arith.constant 0 : index
    %90 = vector.load %arg7[%c0_33, %c0_34] : memref<1x20xi32, #tpu.memory_space<vmem>>, vector<1x20xi32>
    %91 = vector.broadcast %90 : vector<1x20xi32> to vector<16x20xi32>
    %92 = arith.cmpi eq, %89, %91 : vector<16x20xi32>
    %93 = arith.extui %92 : vector<16x20xi1> to vector<16x20xi32>
    %94 = arith.sitofp %93 : vector<16x20xi32> to vector<16x20xf32>
    %95 = tpu.iota {dimensions = array<i32: 1>} : vector<20x10xi32>
    %c0_35 = arith.constant 0 : index
    %c0_36 = arith.constant 0 : index
    %96 = vector.load %arg10[%c0_35, %c0_36] : memref<20x1xi32, #tpu.memory_space<vmem>>, vector<20x1xi32>
    %97 = vector.broadcast %96 : vector<20x1xi32> to vector<20x10xi32>
    %98 = arith.cmpi eq, %95, %97 : vector<20x10xi32>
    %99 = arith.extui %98 : vector<20x10xi1> to vector<20x10xi32>
    %100 = arith.sitofp %99 : vector<20x10xi32> to vector<20x10xf32>
    %cst_37 = arith.constant dense<0.000000e+00> : vector<20x33xf32>
    %101 = tpu.matmul %100, %88, %cst_37 {dimension_numbers = #tpu.dot_dimension_numbers<[1], [0], [0], [1], [0, 0, 1, 1], [], []>} : vector<20x10xf32>, vector<10x33xf32>, vector<20x33xf32> -> vector<20x33xf32>
    %cst_38 = arith.constant dense<0.000000e+00> : vector<16x33xf32>
    %102 = tpu.matmul %94, %101, %cst_38 {dimension_numbers = #tpu.dot_dimension_numbers<[1], [0], [0], [1], [0, 0, 1, 1], [], []>} : vector<16x20xf32>, vector<20x33xf32>, vector<16x33xf32> -> vector<16x33xf32>
    %103 = vector.extract_strided_slice %102 {offsets = [0, 32], sizes = [16, 1], strides = [1, 1]} : vector<16x33xf32> to vector<16x1xf32>
    %cst_39 = arith.constant 1.000000e+00 : f32
    %104 = vector.broadcast %cst_39 : f32 to vector<16x1xf32>
    %105 = arith.maximumf %103, %104 : vector<16x1xf32>
    %106 = vector.broadcast %105 : vector<16x1xf32> to vector<16x33xf32>
    %107 = arith.divf %102, %106 : vector<16x33xf32>
    %108 = tpu.iota {dimensions = array<i32: 1>} : vector<18x12xi32>
    %c0_40 = arith.constant 0 : index
    %c0_41 = arith.constant 0 : index
    %109 = vector.load %arg11[%c0_40, %c0_41] : memref<18x1xi32, #tpu.memory_space<vmem>>, vector<18x1xi32>
    %110 = vector.broadcast %109 : vector<18x1xi32> to vector<18x12xi32>
    %111 = arith.cmpi eq, %108, %110 : vector<18x12xi32>
    %112 = arith.extui %111 : vector<18x12xi1> to vector<18x12xi32>
    %113 = arith.sitofp %112 : vector<18x12xi32> to vector<18x12xf32>
    %cst_42 = arith.constant dense<0.000000e+00> : vector<18x33xf32>
    %114 = tpu.matmul %113, %38, %cst_42 {dimension_numbers = #tpu.dot_dimension_numbers<[1], [0], [0], [1], [0, 0, 1, 1], [], []>} : vector<18x12xf32>, vector<12x33xf32>, vector<18x33xf32> -> vector<18x33xf32>
    %115 = tpu.iota {dimensions = array<i32: 0>} : vector<10x18xi32>
    %c0_43 = arith.constant 0 : index
    %c0_44 = arith.constant 0 : index
    %116 = vector.load %arg12[%c0_43, %c0_44] : memref<1x18xi32, #tpu.memory_space<vmem>>, vector<1x18xi32>
    %117 = vector.broadcast %116 : vector<1x18xi32> to vector<10x18xi32>
    %118 = arith.cmpi eq, %115, %117 : vector<10x18xi32>
    %119 = arith.extui %118 : vector<10x18xi1> to vector<10x18xi32>
    %120 = arith.sitofp %119 : vector<10x18xi32> to vector<10x18xf32>
    %cst_45 = arith.constant dense<0.000000e+00> : vector<10x33xf32>
    %121 = tpu.matmul %120, %114, %cst_45 {dimension_numbers = #tpu.dot_dimension_numbers<[1], [0], [0], [1], [0, 0, 1, 1], [], []>} : vector<10x18xf32>, vector<18x33xf32>, vector<10x33xf32> -> vector<10x33xf32>
    %122 = vector.extract_strided_slice %121 {offsets = [0, 32], sizes = [10, 1], strides = [1, 1]} : vector<10x33xf32> to vector<10x1xf32>
    %cst_46 = arith.constant 1.000000e+00 : f32
    %123 = vector.broadcast %cst_46 : f32 to vector<10x1xf32>
    %124 = arith.maximumf %122, %123 : vector<10x1xf32>
    %125 = vector.broadcast %124 : vector<10x1xf32> to vector<10x33xf32>
    %126 = arith.divf %121, %125 : vector<10x33xf32>
    %127 = arith.addf %126, %5 : vector<10x33xf32>
    %cst_47 = arith.constant 5.000000e-01 : f32
    %128 = vector.broadcast %cst_47 : f32 to vector<10x33xf32>
    %129 = arith.mulf %127, %128 : vector<10x33xf32>
    %cst_48 = arith.constant 1.000000e+00 : f32
    %130 = vector.shape_cast %2 : vector<1x33xi1> to vector<1x33xi1>
    %131 = vector.broadcast %130 : vector<1x33xi1> to vector<10x33xi1>
    %132 = vector.broadcast %cst_48 : f32 to vector<10x33xf32>
    %133 = arith.select %131, %129, %132 : vector<10x33xi1>, vector<10x33xf32>
    %cst_49 = arith.constant dense<0.000000e+00> : vector<20x33xf32>
    %134 = tpu.matmul %100, %133, %cst_49 {dimension_numbers = #tpu.dot_dimension_numbers<[1], [0], [0], [1], [0, 0, 1, 1], [], []>} : vector<20x10xf32>, vector<10x33xf32>, vector<20x33xf32> -> vector<20x33xf32>
    %135 = vector.broadcast %7 : vector<20x1xf32> to vector<20x33xf32>
    %136 = arith.mulf %134, %135 : vector<20x33xf32>
    %137 = vector.shape_cast %2 : vector<1x33xi1> to vector<1x33xi1>
    %138 = vector.broadcast %137 : vector<1x33xi1> to vector<20x33xi1>
    %139 = arith.select %138, %136, %134 : vector<20x33xi1>, vector<20x33xf32>
    %cst_50 = arith.constant dense<0.000000e+00> : vector<16x33xf32>
    %140 = tpu.matmul %94, %139, %cst_50 {dimension_numbers = #tpu.dot_dimension_numbers<[1], [0], [0], [1], [0, 0, 1, 1], [], []>} : vector<16x20xf32>, vector<20x33xf32>, vector<16x33xf32> -> vector<16x33xf32>
    %141 = vector.extract_strided_slice %140 {offsets = [0, 32], sizes = [16, 1], strides = [1, 1]} : vector<16x33xf32> to vector<16x1xf32>
    %cst_51 = arith.constant 1.000000e+00 : f32
    %142 = vector.broadcast %cst_51 : f32 to vector<16x1xf32>
    %143 = arith.maximumf %141, %142 : vector<16x1xf32>
    %144 = vector.broadcast %143 : vector<16x1xf32> to vector<16x33xf32>
    %145 = arith.divf %140, %144 : vector<16x33xf32>
    %c0_52 = arith.constant 0 : index
    %c0_53 = arith.constant 0 : index
    %146 = vector.load %arg15[%c0_52, %c0_53] : memref<33x96xf32, #tpu.memory_space<vmem>>, vector<33x96xf32>
    %cst_54 = arith.constant dense<0.000000e+00> : vector<16x96xf32>
    %147 = tpu.matmul %57, %146, %cst_54 {dimension_numbers = #tpu.dot_dimension_numbers<[1], [0], [0], [1], [0, 0, 1, 1], [], []>} : vector<16x33xf32>, vector<33x96xf32>, vector<16x96xf32> -> vector<16x96xf32>
    %c0_55 = arith.constant 0 : index
    %c0_56 = arith.constant 0 : index
    %148 = vector.load %arg16[%c0_55, %c0_56] : memref<33x96xf32, #tpu.memory_space<vmem>>, vector<33x96xf32>
    %cst_57 = arith.constant dense<0.000000e+00> : vector<16x96xf32>
    %149 = tpu.matmul %107, %148, %cst_57 {dimension_numbers = #tpu.dot_dimension_numbers<[1], [0], [0], [1], [0, 0, 1, 1], [], []>} : vector<16x33xf32>, vector<33x96xf32>, vector<16x96xf32> -> vector<16x96xf32>
    %150 = arith.addf %147, %149 : vector<16x96xf32>
    %c0_58 = arith.constant 0 : index
    %c0_59 = arith.constant 0 : index
    %151 = vector.load %arg17[%c0_58, %c0_59] : memref<33x96xf32, #tpu.memory_space<vmem>>, vector<33x96xf32>
    %cst_60 = arith.constant dense<0.000000e+00> : vector<16x96xf32>
    %152 = tpu.matmul %145, %151, %cst_60 {dimension_numbers = #tpu.dot_dimension_numbers<[1], [0], [0], [1], [0, 0, 1, 1], [], []>} : vector<16x33xf32>, vector<33x96xf32>, vector<16x96xf32> -> vector<16x96xf32>
    %153 = arith.addf %150, %152 : vector<16x96xf32>
    %c0_61 = arith.constant 0 : index
    %c0_62 = arith.constant 0 : index
    %154 = vector.load %arg18[%c0_61, %c0_62] : memref<1x96xf32, #tpu.memory_space<vmem>>, vector<1x96xf32>
    %155 = vector.broadcast %154 : vector<1x96xf32> to vector<16x96xf32>
    %156 = arith.addf %153, %155 : vector<16x96xf32>
    %cst_63 = arith.constant 0.000000e+00 : f32
    %157 = vector.broadcast %cst_63 : f32 to vector<16x96xf32>
    %158 = arith.maximumf %156, %157 : vector<16x96xf32>
    %c0_64 = arith.constant 0 : index
    %c0_65 = arith.constant 0 : index
    %159 = vector.load %arg19[%c0_64, %c0_65] : memref<96x3xf32, #tpu.memory_space<vmem>>, vector<96x3xf32>
    %cst_66 = arith.constant dense<0.000000e+00> : vector<16x3xf32>
    %160 = tpu.matmul %158, %159, %cst_66 {dimension_numbers = #tpu.dot_dimension_numbers<[1], [0], [0], [1], [0, 0, 1, 1], [], []>} : vector<16x96xf32>, vector<96x3xf32>, vector<16x3xf32> -> vector<16x3xf32>
    %161 = vector.extract_strided_slice %160 {offsets = [0, 0], sizes = [16, 1], strides = [1, 1]} : vector<16x3xf32> to vector<16x1xf32>
    %162 = vector.extract_strided_slice %160 {offsets = [0, 1], sizes = [16, 1], strides = [1, 1]} : vector<16x3xf32> to vector<16x1xf32>
    %163 = vector.extract_strided_slice %160 {offsets = [0, 2], sizes = [16, 1], strides = [1, 1]} : vector<16x3xf32> to vector<16x1xf32>
    %164 = arith.maximumf %161, %162 : vector<16x1xf32>
    %165 = arith.maximumf %164, %163 : vector<16x1xf32>
    %166 = arith.subf %161, %165 : vector<16x1xf32>
    %167 = math.exp %166 : vector<16x1xf32>
    %168 = arith.subf %162, %165 : vector<16x1xf32>
    %169 = math.exp %168 : vector<16x1xf32>
    %170 = arith.subf %163, %165 : vector<16x1xf32>
    %171 = math.exp %170 : vector<16x1xf32>
    %172 = arith.addf %167, %169 : vector<16x1xf32>
    %173 = arith.addf %172, %171 : vector<16x1xf32>
    %174 = tpu.reciprocal %173 : vector<16x1xf32> -> vector<16x1xf32>
    %175 = vector.extract_strided_slice %158 {offsets = [0, 0], sizes = [16, 32], strides = [1, 1]} : vector<16x96xf32> to vector<16x32xf32>
    %176 = vector.broadcast %167 : vector<16x1xf32> to vector<16x32xf32>
    %177 = arith.mulf %176, %175 : vector<16x32xf32>
    %178 = vector.extract_strided_slice %158 {offsets = [0, 32], sizes = [16, 32], strides = [1, 1]} : vector<16x96xf32> to vector<16x32xf32>
    %179 = vector.broadcast %169 : vector<16x1xf32> to vector<16x32xf32>
    %180 = arith.mulf %179, %178 : vector<16x32xf32>
    %181 = arith.addf %177, %180 : vector<16x32xf32>
    %182 = vector.extract_strided_slice %158 {offsets = [0, 64], sizes = [16, 32], strides = [1, 1]} : vector<16x96xf32> to vector<16x32xf32>
    %183 = vector.broadcast %171 : vector<16x1xf32> to vector<16x32xf32>
    %184 = arith.mulf %183, %182 : vector<16x32xf32>
    %185 = arith.addf %181, %184 : vector<16x32xf32>
    %186 = vector.broadcast %174 : vector<16x1xf32> to vector<16x32xf32>
    %187 = arith.mulf %185, %186 : vector<16x32xf32>
    %c0_67 = arith.constant 0 : index
    %c0_68 = arith.constant 0 : index
    %188 = vector.load %arg20[%c0_67, %c0_68] : memref<16x32xf32, #tpu.memory_space<vmem>>, vector<16x32xf32>
    tpu.vector_store %arg20[%c0_67, %c0_68], %187 {strides = array<i32>} : memref<16x32xf32, #tpu.memory_space<vmem>>, vector<16x32xf32>,
    return
  }
}

</mosaic_0001>

<llo_original>
// kernel: tpu_custom_call.1
$region0: #{tpu_custom_call.1}
  #allocation0 [shape = 'u32[]', space=smem, size = 0x4, offset = 0x4, fixed_abs, tag = 'smem constant byte address 0x4 - core index']
  #allocation1 [shape = 'u32[144,128]{1,0:T(1,128)}', space=vmem, size = 0x12000, scoped, tag = 'internal scratch']
  %s0 = inlined_call_operand.vmem [shape: f32[16,33], index: 0, kind: input, shape index: {}]
  %s1 = inlined_call_operand.vmem [shape: f32[12,33], index: 1, kind: input, shape index: {}]
  %s2 = inlined_call_operand.vmem [shape: f32[10,33], index: 2, kind: input, shape index: {}]
  %s3 = inlined_call_operand.vmem [shape: s32[1,24], index: 3, kind: input, shape index: {}]
  %s4 = inlined_call_operand.vmem [shape: s32[24,1], index: 4, kind: input, shape index: {}]
  %s5 = inlined_call_operand.vmem [shape: s32[1,24], index: 5, kind: input, shape index: {}]
  %s6 = inlined_call_operand.vmem [shape: s32[24,1], index: 6, kind: input, shape index: {}]
  %s7 = inlined_call_operand.vmem [shape: s32[1,20], index: 7, kind: input, shape index: {}]
  %s8 = inlined_call_operand.vmem [shape: s32[20,1], index: 8, kind: input, shape index: {}]
  %s9 = inlined_call_operand.vmem [shape: s32[1,20], index: 9, kind: input, shape index: {}]
  %s10 = inlined_call_operand.vmem [shape: s32[20,1], index: 10, kind: input, shape index: {}]
  %s11 = inlined_call_operand.vmem [shape: s32[18,1], index: 11, kind: input, shape index: {}]
  %s12 = inlined_call_operand.vmem [shape: s32[1,18], index: 12, kind: input, shape index: {}]
  %s13 = inlined_call_operand.vmem [shape: f32[24,1], index: 13, kind: input, shape index: {}]
  %s14 = inlined_call_operand.vmem [shape: f32[20,1], index: 14, kind: input, shape index: {}]
  %s15 = inlined_call_operand.vmem [shape: f32[33,96], index: 15, kind: input, shape index: {}]
  %s16 = inlined_call_operand.vmem [shape: f32[33,96], index: 16, kind: input, shape index: {}]
  %s17 = inlined_call_operand.vmem [shape: f32[33,96], index: 17, kind: input, shape index: {}]
  %s18 = inlined_call_operand.vmem [shape: f32[1,96], index: 18, kind: input, shape index: {}]
  %s19 = inlined_call_operand.vmem [shape: f32[96,3], index: 19, kind: input, shape index: {}]
  %s20 = inlined_call_operand.hbm [shape: f32[16,32], index: 20, kind: output, shape index: {}]
  %s21 = sld [smem:[#allocation0]]
  $region90: #{tpu_custom_call.1} parent=0
    _
  %s23 = ssub.s32 1, %s21
  %s24 = scalar_select 0, %s23, %s21
  $region1: #{tpu_custom_call.1} parent=0
    #allocation2 [shape = 'u8[8192]{0}', space=vmem, size = 0x2000, scoped, tag = 'output window, operand 0, single buffered']
    #allocation3 [shape = 's32[1]{0}', space=sflag, size = 0x4, scoped, tag = 'scoped memory for tpu_custom_call.1']
    %25 = vsyncpa [#allocation3], 0
    // Predicated region
    $region2: #{tpu_custom_call.1} parent=1 // pred_check
      _
    $region3: #{tpu_custom_call.1} parent=1 // pred_check_branch
      %27 = sbr.rel (0) target = $region5
    $region4: #{tpu_custom_call.1} parent=1 // pred_region
      _
    $region5: #{tpu_custom_call.1} parent=1 // pred_fallthru
      _
    // Predicated region
    $region6: #{tpu_custom_call.1} parent=1 // pred_check
      _
    $region7: #{tpu_custom_call.1} parent=1 // pred_check_branch
      %29 = sbr.rel (0) target = $region9
    $region8: #{tpu_custom_call.1} parent=1 // pred_region
      _
    $region9: #{tpu_custom_call.1} parent=1 // pred_fallthru
      _
    // Predicated region
    $region10: #{tpu_custom_call.1} parent=1 // pred_check
      _
    $region11: #{tpu_custom_call.1} parent=1 // pred_check_branch
      %31 = sbr.rel (0) target = $region13
    $region12: #{tpu_custom_call.1} parent=1 // pred_region
      _
    $region13: #{tpu_custom_call.1} parent=1 // pred_fallthru
      _
    // Predicated region
    $region14: #{tpu_custom_call.1} parent=1 // pred_check
      _
    $region15: #{tpu_custom_call.1} parent=1 // pred_check_branch
      %33 = sbr.rel (0) target = $region17
    $region16: #{tpu_custom_call.1} parent=1 // pred_region
      _
    $region17: #{tpu_custom_call.1} parent=1 // pred_fallthru
      _
    // Predicated region
    $region18: #{tpu_custom_call.1} parent=1 // pred_check
      _
    $region19: #{tpu_custom_call.1} parent=1 // pred_check_branch
      %35 = sbr.rel (0) target = $region21
    $region20: #{tpu_custom_call.1} parent=1 // pred_region
      _
    $region21: #{tpu_custom_call.1} parent=1 // pred_fallthru
      _
    // Predicated region
    $region22: #{tpu_custom_call.1} parent=1 // pred_check
      _
    $region23: #{tpu_custom_call.1} parent=1 // pred_check_branch
      %37 = sbr.rel (0) target = $region25
    $region24: #{tpu_custom_call.1} parent=1 // pred_region
      _
    $region25: #{tpu_custom_call.1} parent=1 // pred_fallthru
      _
    // Predicated region
    $region26: #{tpu_custom_call.1} parent=1 // pred_check
      _
    $region27: #{tpu_custom_call.1} parent=1 // pred_check_branch
      %39 = sbr.rel (0) target = $region29
    $region28: #{tpu_custom_call.1} parent=1 // pred_region
      _
    $region29: #{tpu_custom_call.1} parent=1 // pred_fallthru
      _
    // Predicated region
    $region30: #{tpu_custom_call.1} parent=1 // pred_check
      _
    $region31: #{tpu_custom_call.1} parent=1 // pred_check_branch
      %41 = sbr.rel (0) target = $region33
    $region32: #{tpu_custom_call.1} parent=1 // pred_region
      _
    $region33: #{tpu_custom_call.1} parent=1 // pred_fallthru
      _
    // Predicated region
    $region34: #{tpu_custom_call.1} parent=1 // pred_check
      _
    $region35: #{tpu_custom_call.1} parent=1 // pred_check_branch
      %43 = sbr.rel (0) target = $region37
    $region36: #{tpu_custom_call.1} parent=1 // pred_region
      _
    $region37: #{tpu_custom_call.1} parent=1 // pred_fallthru
      _
    // Predicated region
    $region38: #{tpu_custom_call.1} parent=1 // pred_check
      _
    $region39: #{tpu_custom_call.1} parent=1 // pred_check_branch
      %45 = sbr.rel (0) target = $region41
    $region40: #{tpu_custom_call.1} parent=1 // pred_region
      _
    $region41: #{tpu_custom_call.1} parent=1 // pred_fallthru
      _
    // Predicated region
    $region42: #{tpu_custom_call.1} parent=1 // pred_check
      _
    $region43: #{tpu_custom_call.1} parent=1 // pred_check_branch
      %47 = sbr.rel (0) target = $region45
    $region44: #{tpu_custom_call.1} parent=1 // pred_region
      _
    $region45: #{tpu_custom_call.1} parent=1 // pred_fallthru
      _
    // Predicated region
    $region46: #{tpu_custom_call.1} parent=1 // pred_check
      _
    $region47: #{tpu_custom_call.1} parent=1 // pred_check_branch
      %49 = sbr.rel (0) target = $region49
    $region48: #{tpu_custom_call.1} parent=1 // pred_region
      _
    $region49: #{tpu_custom_call.1} parent=1 // pred_fallthru
      _
    // Predicated region
    $region50: #{tpu_custom_call.1} parent=1 // pred_check
      _
    $region51: #{tpu_custom_call.1} parent=1 // pred_check_branch
      %51 = sbr.rel (0) target = $region53
    $region52: #{tpu_custom_call.1} parent=1 // pred_region
      _
    $region53: #{tpu_custom_call.1} parent=1 // pred_fallthru
      _
    // Predicated region
    $region54: #{tpu_custom_call.1} parent=1 // pred_check
      _
    $region55: #{tpu_custom_call.1} parent=1 // pred_check_branch
      %53 = sbr.rel (0) target = $region57
    $region56: #{tpu_custom_call.1} parent=1 // pred_region
      _
    $region57: #{tpu_custom_call.1} parent=1 // pred_fallthru
      _
    // Predicated region
    $region58: #{tpu_custom_call.1} parent=1 // pred_check
      _
    $region59: #{tpu_custom_call.1} parent=1 // pred_check_branch
      %55 = sbr.rel (0) target = $region61
    $region60: #{tpu_custom_call.1} parent=1 // pred_region
      _
    $region61: #{tpu_custom_call.1} parent=1 // pred_fallthru
      _
    // Predicated region
    $region62: #{tpu_custom_call.1} parent=1 // pred_check
      _
    $region63: #{tpu_custom_call.1} parent=1 // pred_check_branch
      %57 = sbr.rel (0) target = $region65
    $region64: #{tpu_custom_call.1} parent=1 // pred_region
      _
    $region65: #{tpu_custom_call.1} parent=1 // pred_fallthru
      _
    // Predicated region
    $region66: #{tpu_custom_call.1} parent=1 // pred_check
      _
    $region67: #{tpu_custom_call.1} parent=1 // pred_check_branch
      %59 = sbr.rel (0) target = $region69
    $region68: #{tpu_custom_call.1} parent=1 // pred_region
      _
    $region69: #{tpu_custom_call.1} parent=1 // pred_fallthru
      _
    // Predicated region
    $region70: #{tpu_custom_call.1} parent=1 // pred_check
      _
    $region71: #{tpu_custom_call.1} parent=1 // pred_check_branch
      %61 = sbr.rel (0) target = $region73
    $region72: #{tpu_custom_call.1} parent=1 // pred_region
      _
    $region73: #{tpu_custom_call.1} parent=1 // pred_fallthru
      _
    // Predicated region
    $region74: #{tpu_custom_call.1} parent=1 // pred_check
      _
    $region75: #{tpu_custom_call.1} parent=1 // pred_check_branch
      %63 = sbr.rel (0) target = $region77
    $region76: #{tpu_custom_call.1} parent=1 // pred_region
      _
    $region77: #{tpu_custom_call.1} parent=1 // pred_fallthru
      _
    // Predicated region
    $region78: #{tpu_custom_call.1} parent=1 // pred_check
      _
    $region79: #{tpu_custom_call.1} parent=1 // pred_check_branch
      %65 = sbr.rel (0) target = $region81
    $region80: #{tpu_custom_call.1} parent=1 // pred_region
      _
    $region81: #{tpu_custom_call.1} parent=1 // pred_fallthru
      _
    %v66 = vlaneseq
    %v67 = vand.u32 %v66, 127
    %vm68 = vcmp.lt.s32.totalorder %v67, 32
    %v69 = vld [vmem:[%s0] sm:$0xff]
    %v70 = vld [vmem:[%s0 + $0x8] sm:$0xff]
    %v71 = vld [vmem:[%s1] sm:$0xff]
    %v72 = vld [vmem:[%s1 + $0x8] sm:$0xf]
    %v73 = vld [vmem:[%s2] sm:$0xff]
    %v74 = vld [vmem:[%s2 + $0x8] sm:$0x3]
    %v75 = vld [vmem:[%s13] sm:$0xff]
    %v76 = vld [vmem:[%s13 + $0x8] sm:$0xff]
    %v77 = vld [vmem:[%s13 + $0x10] sm:$0xff]
    %v78 = vld [vmem:[%s14] sm:$0xff]
    %v79 = vld [vmem:[%s14 + $0x8] sm:$0xff]
    %v80 = vld [vmem:[%s14 + $0x10] sm:$0xf]
    %v81 = vld [vmem:[%s4] sm:$0xff]
    %v82 = vld [vmem:[%s4 + $0x8] sm:$0xff]
    %v83 = vld [vmem:[%s4 + $0x10] sm:$0xff]
    %84 = vset.pattern.permute.xlu0 0
    %85 = vperm.xlu0 %84, %v81
    %v86 = vpop.permute.xlu0 %85
    %87 = vset.pattern.permute.xlu0 0
    %88 = vperm.xlu0 %87, %v82
    %v89 = vpop.permute.xlu0 %88
    %90 = vset.pattern.permute.xlu0 0
    %91 = vperm.xlu0 %90, %v83
    %v92 = vpop.permute.xlu0 %91
    %vm93 = vcmp.eq.s32.totalorder %v67, %v86
    %vm94 = vcmp.eq.s32.totalorder %v67, %v89
    %vm95 = vcmp.eq.s32.totalorder %v67, %v92
    %v96 = vsel %vm93, 1, 0
    %v97 = vsel %vm94, 1, 0
    %v98 = vsel %vm95, 1, 0
    %v99 = vcvt.s32.f32 %v96
    %v100 = vcvt.s32.f32 %v97
    %v101 = vcvt.s32.f32 %v98
    %vm102 = vcmask 130048
    %v104 = vsel %vm102, %v99, 0
    %v107 = vsel %vm102, %v100, 0
    %v110 = vsel %vm102, %v101, 0
    %112 = vmatprep.subr.mxu0 0.0
    %113 = vmatpush1.msra.mxu0 0.0
    %114 = vmatprep.subr.mxu0 0.0
    %115 = vmatpush1.msra.mxu0 0.0
    %116 = vmatprep.subr.mxu0 0.0
    %117 = vmatpush1.msra.mxu0 0.0
    %118 = vmatprep.subr.mxu0 0.0
    %119 = vmatpush1.msra.mxu0 0.0
    %120 = vmatprep.subr.mxu0 0.0
    %121 = vmatpush1.msra.mxu0 0.0
    %122 = vmatprep.subr.mxu0 0.0
    %123 = vmatpush1.msra.mxu0 0.0
    %124 = vmatprep.subr.mxu0 0.0
    %125 = vmatpush1.msra.mxu0 0.0
    %126 = vmatprep.subr.mxu0 0.0
    %127 = vmatpush1.msra.mxu0 0.0
    %128 = vmatprep.subr.mxu0 0.0
    %129 = vmatpush1.msra.mxu0 0.0
    %130 = vmatprep.subr.mxu0 0.0
    %131 = vmatpush1.msra.mxu0 0.0
    %132 = vmatprep.subr.mxu0 0.0
    %133 = vmatpush1.msra.mxu0 0.0
    %134 = vmatprep.subr.mxu0 0.0
    %135 = vmatpush1.msra.mxu0 0.0
    %136 = vmatprep.subr.mxu0 0.0
    %137 = vmatpush1.msra.mxu0 0.0
    %138 = vmatprep.subr.mxu0 0.0
    %139 = vmatpush1.msra.mxu0 0.0
    %140 = vmatprep.subr.mxu0 0.0
    %141 = vmatpush1.msra.mxu0 %v70
    %142 = vmatprep.subr.mxu0 0.0
    %143 = vmatpush1.msra.mxu0 %v69
    %144 = vmatprep.subr.mxu0 0.0
    %145 = vmatpush2.msra.mxu0 0.0
    %146 = vmatprep.subr.mxu0 0.0
    %147 = vmatpush2.msra.mxu0 0.0
    %148 = vmatprep.subr.mxu0 0.0
    %149 = vmatpush2.msra.mxu0 0.0
    %150 = vmatprep.subr.mxu0 0.0
    %151 = vmatpush2.msra.mxu0 0.0
    %152 = vmatprep.subr.mxu0 0.0
    %153 = vmatpush2.msra.mxu0 0.0
    %154 = vmatprep.subr.mxu0 0.0
    %155 = vmatpush2.msra.mxu0 0.0
    %156 = vmatprep.subr.mxu0 0.0
    %157 = vmatpush2.msra.mxu0 0.0
    %158 = vmatprep.subr.mxu0 0.0
    %159 = vmatpush2.msra.mxu0 0.0
    %160 = vmatprep.subr.mxu0 0.0
    %161 = vmatpush2.msra.mxu0 0.0
    %162 = vmatprep.subr.mxu0 0.0
    %163 = vmatpush2.msra.mxu0 0.0
    %164 = vmatprep.subr.mxu0 0.0
    %165 = vmatpush2.msra.mxu0 0.0
    %166 = vmatprep.subr.mxu0 0.0
    %167 = vmatpush2.msra.mxu0 0.0
    %168 = vmatprep.subr.mxu0 0.0
    %169 = vmatpush2.msra.mxu0 0.0
    %170 = vmatprep.subr.mxu0 0.0
    %171 = vmatpush2.msra.mxu0 0.0
    %172 = vmatprep.subr.mxu0 0.0
    %173 = vmatpush2.msra.mxu0 0.0
    %174 = vmatprep.subr.mxu0 0.0
    %175 = vmatpush2.msra.mxu0 0.0
    %176 = vmatprep.mubr.f32.mxu0 0.0
    %177 = vmatmul.mubr.f32.gmra.mxu0 %v104
    %v178 = vpop.f32.mrf.mxu0
    %v179 = vadd.f32 0.0, %v178
    %v180 = vpop.f32.mrf.mxu0
    %181 = vmatprep.mubr.f32.mxu0 0.0
    %182 = vmatmul.mubr.f32.gmra.mxu0 %v107
    %v183 = vpop.f32.mrf.mxu0
    %v184 = vadd.f32 0.0, %v183
    %v185 = vpop.f32.mrf.mxu0
    %186 = vmatprep.mubr.f32.mxu0 0.0
    %187 = vmatmul.mubr.f32.gmra.mxu0 %v110
    %v188 = vpop.f32.mrf.mxu0
    %v189 = vadd.f32 0.0, %v188
    %v190 = vpop.f32.mrf.mxu0
    %191 = vdwg.mxu0
    %193 = vset.pattern.permute.xlu0 0
    %194 = vperm.xlu0 %193, %v75
    %v195 = vpop.permute.xlu0 %194
    %198 = vset.pattern.permute.xlu0 0
    %199 = vperm.xlu0 %198, %v76
    %v200 = vpop.permute.xlu0 %199
    %203 = vset.pattern.permute.xlu0 0
    %204 = vperm.xlu0 %203, %v77
    %v205 = vpop.permute.xlu0 %204
    %v207 = vmul.f32 %v179, %v195
    %v208 = vmul.f32 %v184, %v200
    %v209 = vmul.f32 %v189, %v205
    %v210 = vsel %vm68, 1, 0
    %vm211 = vcmp.eq.s32.totalorder %v210, 1
    %v212 = vsel %vm211, %v207, %v179
    %v213 = vsel %vm211, %v208, %v184
    %v214 = vsel %vm211, %v209, %v189
    %v215 = vlaneseq
    %v216 = vshrl.u32 %v215, 7
    %v217 = vadd.s32 %v216, 8
    %v218 = vld [vmem:[%s5] sm:$0x1]
    %v219 = vlaneseq
    %v220 = vshrl.u32 %v219, 7
    %v221 = vsub.s32 0, %v220
    %v222 = vrot.slane %v218, %v221
    %vm223 = vcmp.eq.s32.totalorder %v216, %v222
    %vm224 = vcmp.eq.s32.totalorder %v217, %v222
    %v225 = vsel %vm223, 1, 0
    %v226 = vsel %vm224, 1, 0
    %v227 = vcvt.s32.f32 %v225
    %v228 = vcvt.s32.f32 %v226
    %vm229 = vcmask 195584
    %v231 = vsel %vm229, %v227, 0
    %v234 = vsel %vm229, %v228, 0
    %236 = vmatprep.subr.mxu0 0.0
    %237 = vmatpush1.msra.mxu0 0.0
    %238 = vmatprep.subr.mxu0 0.0
    %239 = vmatpush1.msra.mxu0 0.0
    %240 = vmatprep.subr.mxu0 0.0
    %241 = vmatpush1.msra.mxu0 0.0
    %242 = vmatprep.subr.mxu0 0.0
    %243 = vmatpush1.msra.mxu0 0.0
    %244 = vmatprep.subr.mxu0 0.0
    %245 = vmatpush1.msra.mxu0 0.0
    %246 = vmatprep.subr.mxu0 0.0
    %247 = vmatpush1.msra.mxu0 0.0
    %248 = vmatprep.subr.mxu0 0.0
    %249 = vmatpush1.msra.mxu0 0.0
    %250 = vmatprep.subr.mxu0 0.0
    %251 = vmatpush1.msra.mxu0 0.0
    %252 = vmatprep.subr.mxu0 0.0
    %253 = vmatpush1.msra.mxu0 0.0
    %254 = vmatprep.subr.mxu0 0.0
    %255 = vmatpush1.msra.mxu0 0.0
    %256 = vmatprep.subr.mxu0 0.0
    %257 = vmatpush1.msra.mxu0 0.0
    %258 = vmatprep.subr.mxu0 0.0
    %259 = vmatpush1.msra.mxu0 0.0
    %260 = vmatprep.subr.mxu0 0.0
    %261 = vmatpush1.msra.mxu0 0.0
    %262 = vmatprep.subr.mxu0 0.0
    %263 = vmatpush1.msra.mxu0 %v214
    %264 = vmatprep.subr.mxu0 0.0
    %265 = vmatpush1.msra.mxu0 %v213
    %266 = vmatprep.subr.mxu0 0.0
    %267 = vmatpush1.msra.mxu0 %v212
    %268 = vmatprep.subr.mxu0 0.0
    %269 = vmatpush2.msra.mxu0 0.0
    %270 = vmatprep.subr.mxu0 0.0
    %271 = vmatpush2.msra.mxu0 0.0
    %272 = vmatprep.subr.mxu0 0.0
    %273 = vmatpush2.msra.mxu0 0.0
    %274 = vmatprep.subr.mxu0 0.0
    %275 = vmatpush2.msra.mxu0 0.0
    %276 = vmatprep.subr.mxu0 0.0
    %277 = vmatpush2.msra.mxu0 0.0
    %278 = vmatprep.subr.mxu0 0.0
    %279 = vmatpush2.msra.mxu0 0.0
    %280 = vmatprep.subr.mxu0 0.0
    %281 = vmatpush2.msra.mxu0 0.0
    %282 = vmatprep.subr.mxu0 0.0
    %283 = vmatpush2.msra.mxu0 0.0
    %284 = vmatprep.subr.mxu0 0.0
    %285 = vmatpush2.msra.mxu0 0.0
    %286 = vmatprep.subr.mxu0 0.0
    %287 = vmatpush2.msra.mxu0 0.0
    %288 = vmatprep.subr.mxu0 0.0
    %289 = vmatpush2.msra.mxu0 0.0
    %290 = vmatprep.subr.mxu0 0.0
    %291 = vmatpush2.msra.mxu0 0.0
    %292 = vmatprep.subr.mxu0 0.0
    %293 = vmatpush2.msra.mxu0 0.0
    %294 = vmatprep.subr.mxu0 0.0
    %295 = vmatpush2.msra.mxu0 0.0
    %296 = vmatprep.subr.mxu0 0.0
    %297 = vmatpush2.msra.mxu0 0.0
    %298 = vmatprep.subr.mxu0 0.0
    %299 = vmatpush2.msra.mxu0 0.0
    %300 = vmatprep.mubr.f32.mxu0 0.0
    %301 = vmatmul.mubr.f32.gmra.mxu0 %v231
    %v302 = vpop.f32.mrf.mxu0
    %v303 = vadd.f32 0.0, %v302
    %v304 = vpop.f32.mrf.mxu0
    %305 = vmatprep.mubr.f32.mxu0 0.0
    %306 = vmatmul.mubr.f32.gmra.mxu0 %v234
    %v307 = vpop.f32.mrf.mxu0
    %v308 = vadd.f32 0.0, %v307
    %v309 = vpop.f32.mrf.mxu0
    %310 = vdwg.mxu0
    %v311 = vmax.f32 %v303, 1.0
    %v312 = vmax.f32 %v308, 1.0
    %314 = vset.pattern.permute.xlu0 32
    %315 = vperm.xlu0 %314, %v311
    %v316 = vpop.permute.xlu0 %315
    %319 = vset.pattern.permute.xlu0 32
    %320 = vperm.xlu0 %319, %v312
    %v321 = vpop.permute.xlu0 %320
    %v323 = vrcp.pop %v316
    %v324 = vmul.f32 %v303, %v323
    %v325 = vrcp.pop %v321
    %v326 = vmul.f32 %v308, %v325
    %v327 = vadd.f32 %v324, %v71
    %v328 = vadd.f32 %v326, %v72
    %v329 = vmul.f32 %v327, 0.5
    %v330 = vmul.f32 %v328, 0.5
    %v331 = vsel %vm211, %v329, 1.0
    %v332 = vsel %vm211, %v330, 1.0
    %v333 = vld [vmem:[%s3] sm:$0x1]
    %v334 = vlaneseq
    %v335 = vshrl.u32 %v334, 7
    %v336 = vsub.s32 0, %v335
    %v337 = vrot.slane %v333, %v336
    %vm338 = vcmp.eq.s32.totalorder %v216, %v337
    %vm339 = vcmp.eq.s32.totalorder %v217, %v337
    %v340 = vsel %vm338, 1, 0
    %v341 = vsel %vm339, 1, 0
    %v342 = vcvt.s32.f32 %v340
    %v343 = vcvt.s32.f32 %v341
    %v344 = vld [vmem:[%s6] sm:$0xff]
    %v345 = vld [vmem:[%s6 + $0x8] sm:$0xff]
    %v346 = vld [vmem:[%s6 + $0x10] sm:$0xff]
    %347 = vset.pattern.permute.xlu0 0
    %348 = vperm.xlu0 %347, %v344
    %v349 = vpop.permute.xlu0 %348
    %350 = vset.pattern.permute.xlu0 0
    %351 = vperm.xlu0 %350, %v345
    %v352 = vpop.permute.xlu0 %351
    %353 = vset.pattern.permute.xlu0 0
    %354 = vperm.xlu0 %353, %v346
    %v355 = vpop.permute.xlu0 %354
    %vm356 = vcmp.eq.s32.totalorder %v67, %v349
    %vm357 = vcmp.eq.s32.totalorder %v67, %v352
    %vm358 = vcmp.eq.s32.totalorder %v67, %v355
    %v359 = vsel %vm356, 1, 0
    %v360 = vsel %vm357, 1, 0
    %v361 = vsel %vm358, 1, 0
    %v362 = vcvt.s32.f32 %v359
    %v363 = vcvt.s32.f32 %v360
    %v364 = vcvt.s32.f32 %v361
    %vm365 = vcmask 97280
    %v367 = vsel %vm365, %v362, 0
    %v370 = vsel %vm365, %v363, 0
    %v373 = vsel %vm365, %v364, 0
    %vm375 = vcmask 1043456
    %v377 = vsel %vm375, %v332, 0
    %379 = vmatprep.subr.mxu0 0.0
    %380 = vmatpush1.msra.mxu0 0.0
    %381 = vmatprep.subr.mxu0 0.0
    %382 = vmatpush1.msra.mxu0 0.0
    %383 = vmatprep.subr.mxu0 0.0
    %384 = vmatpush1.msra.mxu0 0.0
    %385 = vmatprep.subr.mxu0 0.0
    %386 = vmatpush1.msra.mxu0 0.0
    %387 = vmatprep.subr.mxu0 0.0
    %388 = vmatpush1.msra.mxu0 0.0
    %389 = vmatprep.subr.mxu0 0.0
    %390 = vmatpush1.msra.mxu0 0.0
    %391 = vmatprep.subr.mxu0 0.0
    %392 = vmatpush1.msra.mxu0 0.0
    %393 = vmatprep.subr.mxu0 0.0
    %394 = vmatpush1.msra.mxu0 0.0
    %395 = vmatprep.subr.mxu0 0.0
    %396 = vmatpush1.msra.mxu0 0.0
    %397 = vmatprep.subr.mxu0 0.0
    %398 = vmatpush1.msra.mxu0 0.0
    %399 = vmatprep.subr.mxu0 0.0
    %400 = vmatpush1.msra.mxu0 0.0
    %401 = vmatprep.subr.mxu0 0.0
    %402 = vmatpush1.msra.mxu0 0.0
    %403 = vmatprep.subr.mxu0 0.0
    %404 = vmatpush1.msra.mxu0 0.0
    %405 = vmatprep.subr.mxu0 0.0
    %406 = vmatpush1.msra.mxu0 0.0
    %407 = vmatprep.subr.mxu0 0.0
    %408 = vmatpush1.msra.mxu0 %v377
    %409 = vmatprep.subr.mxu0 0.0
    %410 = vmatpush1.msra.mxu0 %v331
    %411 = vmatprep.subr.mxu0 0.0
    %412 = vmatpush2.msra.mxu0 0.0
    %413 = vmatprep.subr.mxu0 0.0
    %414 = vmatpush2.msra.mxu0 0.0
    %415 = vmatprep.subr.mxu0 0.0
    %416 = vmatpush2.msra.mxu0 0.0
    %417 = vmatprep.subr.mxu0 0.0
    %418 = vmatpush2.msra.mxu0 0.0
    %419 = vmatprep.subr.mxu0 0.0
    %420 = vmatpush2.msra.mxu0 0.0
    %421 = vmatprep.subr.mxu0 0.0
    %422 = vmatpush2.msra.mxu0 0.0
    %423 = vmatprep.subr.mxu0 0.0
    %424 = vmatpush2.msra.mxu0 0.0
    %425 = vmatprep.subr.mxu0 0.0
    %426 = vmatpush2.msra.mxu0 0.0
    %427 = vmatprep.subr.mxu0 0.0
    %428 = vmatpush2.msra.mxu0 0.0
    %429 = vmatprep.subr.mxu0 0.0
    %430 = vmatpush2.msra.mxu0 0.0
    %431 = vmatprep.subr.mxu0 0.0
    %432 = vmatpush2.msra.mxu0 0.0
    %433 = vmatprep.subr.mxu0 0.0
    %434 = vmatpush2.msra.mxu0 0.0
    %435 = vmatprep.subr.mxu0 0.0
    %436 = vmatpush2.msra.mxu0 0.0
    %437 = vmatprep.subr.mxu0 0.0
    %438 = vmatpush2.msra.mxu0 0.0
    %439 = vmatprep.subr.mxu0 0.0
    %440 = vmatpush2.msra.mxu0 0.0
    %441 = vmatprep.subr.mxu0 0.0
    %442 = vmatpush2.msra.mxu0 0.0
    %443 = vmatprep.mubr.f32.mxu0 0.0
    %444 = vmatmul.mubr.f32.gmra.mxu0 %v367
    %v445 = vpop.f32.mrf.mxu0
    %v446 = vadd.f32 0.0, %v445
    %v447 = vpop.f32.mrf.mxu0
    %448 = vmatprep.mubr.f32.mxu0 0.0
    %449 = vmatmul.mubr.f32.gmra.mxu0 %v370
    %v450 = vpop.f32.mrf.mxu0
    %v451 = vadd.f32 0.0, %v450
    %v452 = vpop.f32.mrf.mxu0
    %453 = vmatprep.mubr.f32.mxu0 0.0
    %454 = vmatmul.mubr.f32.gmra.mxu0 %v373
    %v455 = vpop.f32.mrf.mxu0
    %v456 = vadd.f32 0.0, %v455
    %v457 = vpop.f32.mrf.mxu0
    %458 = vdwg.mxu0
    %v460 = vsel %vm229, %v342, 0
    %v463 = vsel %vm229, %v343, 0
    %465 = vmatprep.subr.mxu0 0.0
    %466 = vmatpush1.msra.mxu0 0.0
    %467 = vmatprep.subr.mxu0 0.0
    %468 = vmatpush1.msra.mxu0 0.0
    %469 = vmatprep.subr.mxu0 0.0
    %470 = vmatpush1.msra.mxu0 0.0
    %471 = vmatprep.subr.mxu0 0.0
    %472 = vmatpush1.msra.mxu0 0.0
    %473 = vmatprep.subr.mxu0 0.0
    %474 = vmatpush1.msra.mxu0 0.0
    %475 = vmatprep.subr.mxu0 0.0
    %476 = vmatpush1.msra.mxu0 0.0
    %477 = vmatprep.subr.mxu0 0.0
    %478 = vmatpush1.msra.mxu0 0.0
    %479 = vmatprep.subr.mxu0 0.0
    %480 = vmatpush1.msra.mxu0 0.0
    %481 = vmatprep.subr.mxu0 0.0
    %482 = vmatpush1.msra.mxu0 0.0
    %483 = vmatprep.subr.mxu0 0.0
    %484 = vmatpush1.msra.mxu0 0.0
    %485 = vmatprep.subr.mxu0 0.0
    %486 = vmatpush1.msra.mxu0 0.0
    %487 = vmatprep.subr.mxu0 0.0
    %488 = vmatpush1.msra.mxu0 0.0
    %489 = vmatprep.subr.mxu0 0.0
    %490 = vmatpush1.msra.mxu0 0.0
    %491 = vmatprep.subr.mxu0 0.0
    %492 = vmatpush1.msra.mxu0 %v456
    %493 = vmatprep.subr.mxu0 0.0
    %494 = vmatpush1.msra.mxu0 %v451
    %495 = vmatprep.subr.mxu0 0.0
    %496 = vmatpush1.msra.mxu0 %v446
    %497 = vmatprep.subr.mxu0 0.0
    %498 = vmatpush2.msra.mxu0 0.0
    %499 = vmatprep.subr.mxu0 0.0
    %500 = vmatpush2.msra.mxu0 0.0
    %501 = vmatprep.subr.mxu0 0.0
    %502 = vmatpush2.msra.mxu0 0.0
    %503 = vmatprep.subr.mxu0 0.0
    %504 = vmatpush2.msra.mxu0 0.0
    %505 = vmatprep.subr.mxu0 0.0
    %506 = vmatpush2.msra.mxu0 0.0
    %507 = vmatprep.subr.mxu0 0.0
    %508 = vmatpush2.msra.mxu0 0.0
    %509 = vmatprep.subr.mxu0 0.0
    %510 = vmatpush2.msra.mxu0 0.0
    %511 = vmatprep.subr.mxu0 0.0
    %512 = vmatpush2.msra.mxu0 0.0
    %513 = vmatprep.subr.mxu0 0.0
    %514 = vmatpush2.msra.mxu0 0.0
    %515 = vmatprep.subr.mxu0 0.0
    %516 = vmatpush2.msra.mxu0 0.0
    %517 = vmatprep.subr.mxu0 0.0
    %518 = vmatpush2.msra.mxu0 0.0
    %519 = vmatprep.subr.mxu0 0.0
    %520 = vmatpush2.msra.mxu0 0.0
    %521 = vmatprep.subr.mxu0 0.0
    %522 = vmatpush2.msra.mxu0 0.0
    %523 = vmatprep.subr.mxu0 0.0
    %524 = vmatpush2.msra.mxu0 0.0
    %525 = vmatprep.subr.mxu0 0.0
    %526 = vmatpush2.msra.mxu0 0.0
    %527 = vmatprep.subr.mxu0 0.0
    %528 = vmatpush2.msra.mxu0 0.0
    %529 = vmatprep.mubr.f32.mxu0 0.0
    %530 = vmatmul.mubr.f32.gmra.mxu0 %v460
    %v531 = vpop.f32.mrf.mxu0
    %v532 = vadd.f32 0.0, %v531
    %v533 = vpop.f32.mrf.mxu0
    %534 = vmatprep.mubr.f32.mxu0 0.0
    %535 = vmatmul.mubr.f32.gmra.mxu0 %v463
    %v536 = vpop.f32.mrf.mxu0
    %v537 = vadd.f32 0.0, %v536
    %v538 = vpop.f32.mrf.mxu0
    %539 = vdwg.mxu0
    %v540 = vmax.f32 %v532, 1.0
    %v541 = vmax.f32 %v537, 1.0
    %543 = vset.pattern.permute.xlu0 32
    %544 = vperm.xlu0 %543, %v540
    %v545 = vpop.permute.xlu0 %544
    %548 = vset.pattern.permute.xlu0 32
    %549 = vperm.xlu0 %548, %v541
    %v550 = vpop.permute.xlu0 %549
    %v552 = vrcp.pop %v545
    %v553 = vmul.f32 %v532, %v552
    %v554 = vrcp.pop %v550
    %v555 = vmul.f32 %v537, %v554
    %v556 = vld [vmem:[%s8] sm:$0xff]
    %v557 = vld [vmem:[%s8 + $0x8] sm:$0xff]
    %v558 = vld [vmem:[%s8 + $0x10] sm:$0xf]
    %559 = vset.pattern.permute.xlu0 0
    %560 = vperm.xlu0 %559, %v556
    %v561 = vpop.permute.xlu0 %560
    %562 = vset.pattern.permute.xlu0 0
    %563 = vperm.xlu0 %562, %v557
    %v564 = vpop.permute.xlu0 %563
    %565 = vset.pattern.permute.xlu0 0
    %566 = vperm.xlu0 %565, %v558
    %v567 = vpop.permute.xlu0 %566
    %vm568 = vcmp.eq.s32.totalorder %v67, %v561
    %vm569 = vcmp.eq.s32.totalorder %v67, %v564
    %vm570 = vcmp.eq.s32.totalorder %v67, %v567
    %v571 = vsel %vm568, 1, 0
    %v572 = vsel %vm569, 1, 0
    %v573 = vsel %vm570, 1, 0
    %v574 = vcvt.s32.f32 %v571
    %v575 = vcvt.s32.f32 %v572
    %v576 = vcvt.s32.f32 %v573
    %v578 = vsel %vm102, %v574, 0
    %v581 = vsel %vm102, %v575, 0
    %v584 = vsel %vm102, %v576, 0
    %586 = vmatprep.subr.mxu0 0.0
    %587 = vmatpush1.msra.mxu0 0.0
    %588 = vmatprep.subr.mxu0 0.0
    %589 = vmatpush1.msra.mxu0 0.0
    %590 = vmatprep.subr.mxu0 0.0
    %591 = vmatpush1.msra.mxu0 0.0
    %592 = vmatprep.subr.mxu0 0.0
    %593 = vmatpush1.msra.mxu0 0.0
    %594 = vmatprep.subr.mxu0 0.0
    %595 = vmatpush1.msra.mxu0 0.0
    %596 = vmatprep.subr.mxu0 0.0
    %597 = vmatpush1.msra.mxu0 0.0
    %598 = vmatprep.subr.mxu0 0.0
    %599 = vmatpush1.msra.mxu0 0.0
    %600 = vmatprep.subr.mxu0 0.0
    %601 = vmatpush1.msra.mxu0 0.0
    %602 = vmatprep.subr.mxu0 0.0
    %603 = vmatpush1.msra.mxu0 0.0
    %604 = vmatprep.subr.mxu0 0.0
    %605 = vmatpush1.msra.mxu0 0.0
    %606 = vmatprep.subr.mxu0 0.0
    %607 = vmatpush1.msra.mxu0 0.0
    %608 = vmatprep.subr.mxu0 0.0
    %609 = vmatpush1.msra.mxu0 0.0
    %610 = vmatprep.subr.mxu0 0.0
    %611 = vmatpush1.msra.mxu0 0.0
    %612 = vmatprep.subr.mxu0 0.0
    %613 = vmatpush1.msra.mxu0 0.0
    %614 = vmatprep.subr.mxu0 0.0
    %615 = vmatpush1.msra.mxu0 %v70
    %616 = vmatprep.subr.mxu0 0.0
    %617 = vmatpush1.msra.mxu0 %v69
    %618 = vmatprep.subr.mxu0 0.0
    %619 = vmatpush2.msra.mxu0 0.0
    %620 = vmatprep.subr.mxu0 0.0
    %621 = vmatpush2.msra.mxu0 0.0
    %622 = vmatprep.subr.mxu0 0.0
    %623 = vmatpush2.msra.mxu0 0.0
    %624 = vmatprep.subr.mxu0 0.0
    %625 = vmatpush2.msra.mxu0 0.0
    %626 = vmatprep.subr.mxu0 0.0
    %627 = vmatpush2.msra.mxu0 0.0
    %628 = vmatprep.subr.mxu0 0.0
    %629 = vmatpush2.msra.mxu0 0.0
    %630 = vmatprep.subr.mxu0 0.0
    %631 = vmatpush2.msra.mxu0 0.0
    %632 = vmatprep.subr.mxu0 0.0
    %633 = vmatpush2.msra.mxu0 0.0
    %634 = vmatprep.subr.mxu0 0.0
    %635 = vmatpush2.msra.mxu0 0.0
    %636 = vmatprep.subr.mxu0 0.0
    %637 = vmatpush2.msra.mxu0 0.0
    %638 = vmatprep.subr.mxu0 0.0
    %639 = vmatpush2.msra.mxu0 0.0
    %640 = vmatprep.subr.mxu0 0.0
    %641 = vmatpush2.msra.mxu0 0.0
    %642 = vmatprep.subr.mxu0 0.0
    %643 = vmatpush2.msra.mxu0 0.0
    %644 = vmatprep.subr.mxu0 0.0
    %645 = vmatpush2.msra.mxu0 0.0
    %646 = vmatprep.subr.mxu0 0.0
    %647 = vmatpush2.msra.mxu0 0.0
    %648 = vmatprep.subr.mxu0 0.0
    %649 = vmatpush2.msra.mxu0 0.0
    %650 = vmatprep.mubr.f32.mxu0 0.0
    %651 = vmatmul.mubr.f32.gmra.mxu0 %v578
    %v652 = vpop.f32.mrf.mxu0
    %v653 = vadd.f32 0.0, %v652
    %v654 = vpop.f32.mrf.mxu0
    %655 = vmatprep.mubr.f32.mxu0 0.0
    %656 = vmatmul.mubr.f32.gmra.mxu0 %v581
    %v657 = vpop.f32.mrf.mxu0
    %v658 = vadd.f32 0.0, %v657
    %v659 = vpop.f32.mrf.mxu0
    %660 = vmatprep.mubr.f32.mxu0 0.0
    %661 = vmatmul.mubr.f32.gmra.mxu0 %v584
    %v662 = vpop.f32.mrf.mxu0
    %v663 = vadd.f32 0.0, %v662
    %v664 = vpop.f32.mrf.mxu0
    %665 = vdwg.mxu0
    %667 = vset.pattern.permute.xlu0 0
    %668 = vperm.xlu0 %667, %v78
    %v669 = vpop.permute.xlu0 %668
    %672 = vset.pattern.permute.xlu0 0
    %673 = vperm.xlu0 %672, %v79
    %v674 = vpop.permute.xlu0 %673
    %677 = vset.pattern.permute.xlu0 0
    %678 = vperm.xlu0 %677, %v80
    %v679 = vpop.permute.xlu0 %678
    %v681 = vmul.f32 %v653, %v669
    %v682 = vmul.f32 %v658, %v674
    %v683 = vmul.f32 %v663, %v679
    %v684 = vsel %vm211, %v681, %v653
    %v685 = vsel %vm211, %v682, %v658
    %v686 = vsel %vm211, %v683, %v663
    %v687 = vld [vmem:[%s9] sm:$0x1]
    %v688 = vlaneseq
    %v689 = vshrl.u32 %v688, 7
    %v690 = vsub.s32 0, %v689
    %v691 = vrot.slane %v687, %v690
    %vm692 = vcmp.eq.s32.totalorder %v216, %v691
    %vm693 = vcmp.eq.s32.totalorder %v217, %v691
    %v694 = vsel %vm692, 1, 0
    %v695 = vsel %vm693, 1, 0
    %v696 = vcvt.s32.f32 %v694
    %v697 = vcvt.s32.f32 %v695
    %vm698 = vcmask 162816
    %v700 = vsel %vm698, %v696, 0
    %v703 = vsel %vm698, %v697, 0
    %v706 = vsel %vm375, %v686, 0
    %708 = vmatprep.subr.mxu0 0.0
    %709 = vmatpush1.msra.mxu0 0.0
    %710 = vmatprep.subr.mxu0 0.0
    %711 = vmatpush1.msra.mxu0 0.0
    %712 = vmatprep.subr.mxu0 0.0
    %713 = vmatpush1.msra.mxu0 0.0
    %714 = vmatprep.subr.mxu0 0.0
    %715 = vmatpush1.msra.mxu0 0.0
    %716 = vmatprep.subr.mxu0 0.0
    %717 = vmatpush1.msra.mxu0 0.0
    %718 = vmatprep.subr.mxu0 0.0
    %719 = vmatpush1.msra.mxu0 0.0
    %720 = vmatprep.subr.mxu0 0.0
    %721 = vmatpush1.msra.mxu0 0.0
    %722 = vmatprep.subr.mxu0 0.0
    %723 = vmatpush1.msra.mxu0 0.0
    %724 = vmatprep.subr.mxu0 0.0
    %725 = vmatpush1.msra.mxu0 0.0
    %726 = vmatprep.subr.mxu0 0.0
    %727 = vmatpush1.msra.mxu0 0.0
    %728 = vmatprep.subr.mxu0 0.0
    %729 = vmatpush1.msra.mxu0 0.0
    %730 = vmatprep.subr.mxu0 0.0
    %731 = vmatpush1.msra.mxu0 0.0
    %732 = vmatprep.subr.mxu0 0.0
    %733 = vmatpush1.msra.mxu0 0.0
    %734 = vmatprep.subr.mxu0 0.0
    %735 = vmatpush1.msra.mxu0 %v706
    %736 = vmatprep.subr.mxu0 0.0
    %737 = vmatpush1.msra.mxu0 %v685
    %738 = vmatprep.subr.mxu0 0.0
    %739 = vmatpush1.msra.mxu0 %v684
    %740 = vmatprep.subr.mxu0 0.0
    %741 = vmatpush2.msra.mxu0 0.0
    %742 = vmatprep.subr.mxu0 0.0
    %743 = vmatpush2.msra.mxu0 0.0
    %744 = vmatprep.subr.mxu0 0.0
    %745 = vmatpush2.msra.mxu0 0.0
    %746 = vmatprep.subr.mxu0 0.0
    %747 = vmatpush2.msra.mxu0 0.0
    %748 = vmatprep.subr.mxu0 0.0
    %749 = vmatpush2.msra.mxu0 0.0
    %750 = vmatprep.subr.mxu0 0.0
    %751 = vmatpush2.msra.mxu0 0.0
    %752 = vmatprep.subr.mxu0 0.0
    %753 = vmatpush2.msra.mxu0 0.0
    %754 = vmatprep.subr.mxu0 0.0
    %755 = vmatpush2.msra.mxu0 0.0
    %756 = vmatprep.subr.mxu0 0.0
    %757 = vmatpush2.msra.mxu0 0.0
    %758 = vmatprep.subr.mxu0 0.0
    %759 = vmatpush2.msra.mxu0 0.0
    %760 = vmatprep.subr.mxu0 0.0
    %761 = vmatpush2.msra.mxu0 0.0
    %762 = vmatprep.subr.mxu0 0.0
    %763 = vmatpush2.msra.mxu0 0.0
    %764 = vmatprep.subr.mxu0 0.0
    %765 = vmatpush2.msra.mxu0 0.0
    %766 = vmatprep.subr.mxu0 0.0
    %767 = vmatpush2.msra.mxu0 0.0
    %768 = vmatprep.subr.mxu0 0.0
    %769 = vmatpush2.msra.mxu0 0.0
    %770 = vmatprep.subr.mxu0 0.0
    %771 = vmatpush2.msra.mxu0 0.0
    %772 = vmatprep.mubr.f32.mxu0 0.0
    %773 = vmatmul.mubr.f32.gmra.mxu0 %v700
    %v774 = vpop.f32.mrf.mxu0
    %v775 = vadd.f32 0.0, %v774
    %v776 = vpop.f32.mrf.mxu0
    %777 = vmatprep.mubr.f32.mxu0 0.0
    %778 = vmatmul.mubr.f32.gmra.mxu0 %v703
    %v779 = vpop.f32.mrf.mxu0
    %v780 = vadd.f32 0.0, %v779
    %v781 = vpop.f32.mrf.mxu0
    %782 = vdwg.mxu0
    %v783 = vmax.f32 %v775, 1.0
    %v784 = vmax.f32 %v780, 1.0
    %786 = vset.pattern.permute.xlu0 32
    %787 = vperm.xlu0 %786, %v783
    %v788 = vpop.permute.xlu0 %787
    %791 = vset.pattern.permute.xlu0 32
    %792 = vperm.xlu0 %791, %v784
    %v793 = vpop.permute.xlu0 %792
    %v795 = vrcp.pop %v788
    %v796 = vmul.f32 %v775, %v795
    %v797 = vrcp.pop %v793
    %v798 = vmul.f32 %v780, %v797
    %v799 = vadd.f32 %v796, %v73
    %v800 = vadd.f32 %v798, %v74
    %v801 = vmul.f32 %v799, 0.5
    %v802 = vmul.f32 %v800, 0.5
    %v803 = vsel %vm211, %v801, 1.0
    %v804 = vsel %vm211, %v802, 1.0
    %v805 = vld [vmem:[%s7] sm:$0x1]
    %v806 = vlaneseq
    %v807 = vshrl.u32 %v806, 7
    %v808 = vsub.s32 0, %v807
    %v809 = vrot.slane %v805, %v808
    %vm810 = vcmp.eq.s32.totalorder %v216, %v809
    %vm811 = vcmp.eq.s32.totalorder %v217, %v809
    %v812 = vsel %vm810, 1, 0
    %v813 = vsel %vm811, 1, 0
    %v814 = vcvt.s32.f32 %v812
    %v815 = vcvt.s32.f32 %v813
    %v816 = vld [vmem:[%s10] sm:$0xff]
    %v817 = vld [vmem:[%s10 + $0x8] sm:$0xff]
    %v818 = vld [vmem:[%s10 + $0x10] sm:$0xf]
    %819 = vset.pattern.permute.xlu0 0
    %820 = vperm.xlu0 %819, %v816
    %v821 = vpop.permute.xlu0 %820
    %822 = vset.pattern.permute.xlu0 0
    %823 = vperm.xlu0 %822, %v817
    %v824 = vpop.permute.xlu0 %823
    %825 = vset.pattern.permute.xlu0 0
    %826 = vperm.xlu0 %825, %v818
    %v827 = vpop.permute.xlu0 %826
    %vm828 = vcmp.eq.s32.totalorder %v67, %v821
    %vm829 = vcmp.eq.s32.totalorder %v67, %v824
    %vm830 = vcmp.eq.s32.totalorder %v67, %v827
    %v831 = vsel %vm828, 1, 0
    %v832 = vsel %vm829, 1, 0
    %v833 = vsel %vm830, 1, 0
    %v834 = vcvt.s32.f32 %v831
    %v835 = vcvt.s32.f32 %v832
    %v836 = vcvt.s32.f32 %v833
    %vm837 = vcmask 80896
    %v839 = vsel %vm837, %v834, 0
    %v842 = vsel %vm837, %v835, 0
    %v845 = vsel %vm837, %v836, 0
    %vm847 = vcmask 1041408
    %v849 = vsel %vm847, %v804, 0
    %851 = vmatprep.subr.mxu0 0.0
    %852 = vmatpush1.msra.mxu0 0.0
    %853 = vmatprep.subr.mxu0 0.0
    %854 = vmatpush1.msra.mxu0 0.0
    %855 = vmatprep.subr.mxu0 0.0
    %856 = vmatpush1.msra.mxu0 0.0
    %857 = vmatprep.subr.mxu0 0.0
    %858 = vmatpush1.msra.mxu0 0.0
    %859 = vmatprep.subr.mxu0 0.0
    %860 = vmatpush1.msra.mxu0 0.0
    %861 = vmatprep.subr.mxu0 0.0
    %862 = vmatpush1.msra.mxu0 0.0
    %863 = vmatprep.subr.mxu0 0.0
    %864 = vmatpush1.msra.mxu0 0.0
    %865 = vmatprep.subr.mxu0 0.0
    %866 = vmatpush1.msra.mxu0 0.0
    %867 = vmatprep.subr.mxu0 0.0
    %868 = vmatpush1.msra.mxu0 0.0
    %869 = vmatprep.subr.mxu0 0.0
    %870 = vmatpush1.msra.mxu0 0.0
    %871 = vmatprep.subr.mxu0 0.0
    %872 = vmatpush1.msra.mxu0 0.0
    %873 = vmatprep.subr.mxu0 0.0
    %874 = vmatpush1.msra.mxu0 0.0
    %875 = vmatprep.subr.mxu0 0.0
    %876 = vmatpush1.msra.mxu0 0.0
    %877 = vmatprep.subr.mxu0 0.0
    %878 = vmatpush1.msra.mxu0 0.0
    %879 = vmatprep.subr.mxu0 0.0
    %880 = vmatpush1.msra.mxu0 %v849
    %881 = vmatprep.subr.mxu0 0.0
    %882 = vmatpush1.msra.mxu0 %v803
    %883 = vmatprep.subr.mxu0 0.0
    %884 = vmatpush2.msra.mxu0 0.0
    %885 = vmatprep.subr.mxu0 0.0
    %886 = vmatpush2.msra.mxu0 0.0
    %887 = vmatprep.subr.mxu0 0.0
    %888 = vmatpush2.msra.mxu0 0.0
    %889 = vmatprep.subr.mxu0 0.0
    %890 = vmatpush2.msra.mxu0 0.0
    %891 = vmatprep.subr.mxu0 0.0
    %892 = vmatpush2.msra.mxu0 0.0
    %893 = vmatprep.subr.mxu0 0.0
    %894 = vmatpush2.msra.mxu0 0.0
    %895 = vmatprep.subr.mxu0 0.0
    %896 = vmatpush2.msra.mxu0 0.0
    %897 = vmatprep.subr.mxu0 0.0
    %898 = vmatpush2.msra.mxu0 0.0
    %899 = vmatprep.subr.mxu0 0.0
    %900 = vmatpush2.msra.mxu0 0.0
    %901 = vmatprep.subr.mxu0 0.0
    %902 = vmatpush2.msra.mxu0 0.0
    %903 = vmatprep.subr.mxu0 0.0
    %904 = vmatpush2.msra.mxu0 0.0
    %905 = vmatprep.subr.mxu0 0.0
    %906 = vmatpush2.msra.mxu0 0.0
    %907 = vmatprep.subr.mxu0 0.0
    %908 = vmatpush2.msra.mxu0 0.0
    %909 = vmatprep.subr.mxu0 0.0
    %910 = vmatpush2.msra.mxu0 0.0
    %911 = vmatprep.subr.mxu0 0.0
    %912 = vmatpush2.msra.mxu0 0.0
    %913 = vmatprep.subr.mxu0 0.0
    %914 = vmatpush2.msra.mxu0 0.0
    %915 = vmatprep.mubr.f32.mxu0 0.0
    %916 = vmatmul.mubr.f32.gmra.mxu0 %v839
    %v917 = vpop.f32.mrf.mxu0
    %v918 = vadd.f32 0.0, %v917
    %v919 = vpop.f32.mrf.mxu0
    %920 = vmatprep.mubr.f32.mxu0 0.0
    %921 = vmatmul.mubr.f32.gmra.mxu0 %v842
    %v922 = vpop.f32.mrf.mxu0
    %v923 = vadd.f32 0.0, %v922
    %v924 = vpop.f32.mrf.mxu0
    %925 = vmatprep.mubr.f32.mxu0 0.0
    %926 = vmatmul.mubr.f32.gmra.mxu0 %v845
    %v927 = vpop.f32.mrf.mxu0
    %v928 = vadd.f32 0.0, %v927
    %v929 = vpop.f32.mrf.mxu0
    %930 = vdwg.mxu0
    %v932 = vsel %vm698, %v814, 0
    %v935 = vsel %vm698, %v815, 0
    %v938 = vsel %vm375, %v928, 0
    %940 = vmatprep.subr.mxu0 0.0
    %941 = vmatpush1.msra.mxu0 0.0
    %942 = vmatprep.subr.mxu0 0.0
    %943 = vmatpush1.msra.mxu0 0.0
    %944 = vmatprep.subr.mxu0 0.0
    %945 = vmatpush1.msra.mxu0 0.0
    %946 = vmatprep.subr.mxu0 0.0
    %947 = vmatpush1.msra.mxu0 0.0
    %948 = vmatprep.subr.mxu0 0.0
    %949 = vmatpush1.msra.mxu0 0.0
    %950 = vmatprep.subr.mxu0 0.0
    %951 = vmatpush1.msra.mxu0 0.0
    %952 = vmatprep.subr.mxu0 0.0
    %953 = vmatpush1.msra.mxu0 0.0
    %954 = vmatprep.subr.mxu0 0.0
    %955 = vmatpush1.msra.mxu0 0.0
    %956 = vmatprep.subr.mxu0 0.0
    %957 = vmatpush1.msra.mxu0 0.0
    %958 = vmatprep.subr.mxu0 0.0
    %959 = vmatpush1.msra.mxu0 0.0
    %960 = vmatprep.subr.mxu0 0.0
    %961 = vmatpush1.msra.mxu0 0.0
    %962 = vmatprep.subr.mxu0 0.0
    %963 = vmatpush1.msra.mxu0 0.0
    %964 = vmatprep.subr.mxu0 0.0
    %965 = vmatpush1.msra.mxu0 0.0
    %966 = vmatprep.subr.mxu0 0.0
    %967 = vmatpush1.msra.mxu0 %v938
    %968 = vmatprep.subr.mxu0 0.0
    %969 = vmatpush1.msra.mxu0 %v923
    %970 = vmatprep.subr.mxu0 0.0
    %971 = vmatpush1.msra.mxu0 %v918
    %972 = vmatprep.subr.mxu0 0.0
    %973 = vmatpush2.msra.mxu0 0.0
    %974 = vmatprep.subr.mxu0 0.0
    %975 = vmatpush2.msra.mxu0 0.0
    %976 = vmatprep.subr.mxu0 0.0
    %977 = vmatpush2.msra.mxu0 0.0
    %978 = vmatprep.subr.mxu0 0.0
    %979 = vmatpush2.msra.mxu0 0.0
    %980 = vmatprep.subr.mxu0 0.0
    %981 = vmatpush2.msra.mxu0 0.0
    %982 = vmatprep.subr.mxu0 0.0
    %983 = vmatpush2.msra.mxu0 0.0
    %984 = vmatprep.subr.mxu0 0.0
    %985 = vmatpush2.msra.mxu0 0.0
    %986 = vmatprep.subr.mxu0 0.0
    %987 = vmatpush2.msra.mxu0 0.0
    %988 = vmatprep.subr.mxu0 0.0
    %989 = vmatpush2.msra.mxu0 0.0
    %990 = vmatprep.subr.mxu0 0.0
    %991 = vmatpush2.msra.mxu0 0.0
    %992 = vmatprep.subr.mxu0 0.0
    %993 = vmatpush2.msra.mxu0 0.0
    %994 = vmatprep.subr.mxu0 0.0
    %995 = vmatpush2.msra.mxu0 0.0
    %996 = vmatprep.subr.mxu0 0.0
    %997 = vmatpush2.msra.mxu0 0.0
    %998 = vmatprep.subr.mxu0 0.0
    %999 = vmatpush2.msra.mxu0 0.0
    %1000 = vmatprep.subr.mxu0 0.0
    %1001 = vmatpush2.msra.mxu0 0.0
    %1002 = vmatprep.subr.mxu0 0.0
    %1003 = vmatpush2.msra.mxu0 0.0
    %1004 = vmatprep.mubr.f32.mxu0 0.0
    %1005 = vmatmul.mubr.f32.gmra.mxu0 %v932
    %v1006 = vpop.f32.mrf.mxu0
    %v1007 = vadd.f32 0.0, %v1006
    %v1008 = vpop.f32.mrf.mxu0
    %1009 = vmatprep.mubr.f32.mxu0 0.0
    %1010 = vmatmul.mubr.f32.gmra.mxu0 %v935
    %v1011 = vpop.f32.mrf.mxu0
    %v1012 = vadd.f32 0.0, %v1011
    %v1013 = vpop.f32.mrf.mxu0
    %1014 = vdwg.mxu0
    %v1015 = vmax.f32 %v1007, 1.0
    %v1016 = vmax.f32 %v1012, 1.0
    %1018 = vset.pattern.permute.xlu0 32
    %1019 = vperm.xlu0 %1018, %v1015
    %v1020 = vpop.permute.xlu0 %1019
    %1023 = vset.pattern.permute.xlu0 32
    %1024 = vperm.xlu0 %1023, %v1016
    %v1025 = vpop.permute.xlu0 %1024
    %v1027 = vrcp.pop %v1020
    %v1028 = vmul.f32 %v1007, %v1027
    %v1029 = vrcp.pop %v1025
    %v1030 = vmul.f32 %v1012, %v1029
    %v1031 = vld [vmem:[%s11] sm:$0xff]
    %v1032 = vld [vmem:[%s11 + $0x8] sm:$0xff]
    %v1033 = vld [vmem:[%s11 + $0x10] sm:$0x3]
    %1034 = vset.pattern.permute.xlu0 0
    %1035 = vperm.xlu0 %1034, %v1031
    %v1036 = vpop.permute.xlu0 %1035
    %1037 = vset.pattern.permute.xlu0 0
    %1038 = vperm.xlu0 %1037, %v1032
    %v1039 = vpop.permute.xlu0 %1038
    %1040 = vset.pattern.permute.xlu0 0
    %1041 = vperm.xlu0 %1040, %v1033
    %v1042 = vpop.permute.xlu0 %1041
    %vm1043 = vcmp.eq.s32.totalorder %v67, %v1036
    %vm1044 = vcmp.eq.s32.totalorder %v67, %v1039
    %vm1045 = vcmp.eq.s32.totalorder %v67, %v1042
    %v1046 = vsel %vm1043, 1, 0
    %v1047 = vsel %vm1044, 1, 0
    %v1048 = vsel %vm1045, 1, 0
    %v1049 = vcvt.s32.f32 %v1046
    %v1050 = vcvt.s32.f32 %v1047
    %v1051 = vcvt.s32.f32 %v1048
    %v1053 = vsel %vm365, %v1049, 0
    %v1056 = vsel %vm365, %v1050, 0
    %v1059 = vsel %vm365, %v1051, 0
    %1061 = vmatprep.subr.mxu0 0.0
    %1062 = vmatpush1.msra.mxu0 0.0
    %1063 = vmatprep.subr.mxu0 0.0
    %1064 = vmatpush1.msra.mxu0 0.0
    %1065 = vmatprep.subr.mxu0 0.0
    %1066 = vmatpush1.msra.mxu0 0.0
    %1067 = vmatprep.subr.mxu0 0.0
    %1068 = vmatpush1.msra.mxu0 0.0
    %1069 = vmatprep.subr.mxu0 0.0
    %1070 = vmatpush1.msra.mxu0 0.0
    %1071 = vmatprep.subr.mxu0 0.0
    %1072 = vmatpush1.msra.mxu0 0.0
    %1073 = vmatprep.subr.mxu0 0.0
    %1074 = vmatpush1.msra.mxu0 0.0
    %1075 = vmatprep.subr.mxu0 0.0
    %1076 = vmatpush1.msra.mxu0 0.0
    %1077 = vmatprep.subr.mxu0 0.0
    %1078 = vmatpush1.msra.mxu0 0.0
    %1079 = vmatprep.subr.mxu0 0.0
    %1080 = vmatpush1.msra.mxu0 0.0
    %1081 = vmatprep.subr.mxu0 0.0
    %1082 = vmatpush1.msra.mxu0 0.0
    %1083 = vmatprep.subr.mxu0 0.0
    %1084 = vmatpush1.msra.mxu0 0.0
    %1085 = vmatprep.subr.mxu0 0.0
    %1086 = vmatpush1.msra.mxu0 0.0
    %1087 = vmatprep.subr.mxu0 0.0
    %1088 = vmatpush1.msra.mxu0 0.0
    %1089 = vmatprep.subr.mxu0 0.0
    %1090 = vmatpush1.msra.mxu0 %v377
    %1091 = vmatprep.subr.mxu0 0.0
    %1092 = vmatpush1.msra.mxu0 %v331
    %1093 = vmatprep.subr.mxu0 0.0
    %1094 = vmatpush2.msra.mxu0 0.0
    %1095 = vmatprep.subr.mxu0 0.0
    %1096 = vmatpush2.msra.mxu0 0.0
    %1097 = vmatprep.subr.mxu0 0.0
    %1098 = vmatpush2.msra.mxu0 0.0
    %1099 = vmatprep.subr.mxu0 0.0
    %1100 = vmatpush2.msra.mxu0 0.0
    %1101 = vmatprep.subr.mxu0 0.0
    %1102 = vmatpush2.msra.mxu0 0.0
    %1103 = vmatprep.subr.mxu0 0.0
    %1104 = vmatpush2.msra.mxu0 0.0
    %1105 = vmatprep.subr.mxu0 0.0
    %1106 = vmatpush2.msra.mxu0 0.0
    %1107 = vmatprep.subr.mxu0 0.0
    %1108 = vmatpush2.msra.mxu0 0.0
    %1109 = vmatprep.subr.mxu0 0.0
    %1110 = vmatpush2.msra.mxu0 0.0
    %1111 = vmatprep.subr.mxu0 0.0
    %1112 = vmatpush2.msra.mxu0 0.0
    %1113 = vmatprep.subr.mxu0 0.0
    %1114 = vmatpush2.msra.mxu0 0.0
    %1115 = vmatprep.subr.mxu0 0.0
    %1116 = vmatpush2.msra.mxu0 0.0
    %1117 = vmatprep.subr.mxu0 0.0
    %1118 = vmatpush2.msra.mxu0 0.0
    %1119 = vmatprep.subr.mxu0 0.0
    %1120 = vmatpush2.msra.mxu0 0.0
    %1121 = vmatprep.subr.mxu0 0.0
    %1122 = vmatpush2.msra.mxu0 0.0
    %1123 = vmatprep.subr.mxu0 0.0
    %1124 = vmatpush2.msra.mxu0 0.0
    %1125 = vmatprep.mubr.f32.mxu0 0.0
    %1126 = vmatmul.mubr.f32.gmra.mxu0 %v1053
    %v1127 = vpop.f32.mrf.mxu0
    %v1128 = vadd.f32 0.0, %v1127
    %v1129 = vpop.f32.mrf.mxu0
    %1130 = vmatprep.mubr.f32.mxu0 0.0
    %1131 = vmatmul.mubr.f32.gmra.mxu0 %v1056
    %v1132 = vpop.f32.mrf.mxu0
    %v1133 = vadd.f32 0.0, %v1132
    %v1134 = vpop.f32.mrf.mxu0
    %1135 = vmatprep.mubr.f32.mxu0 0.0
    %1136 = vmatmul.mubr.f32.gmra.mxu0 %v1059
    %v1137 = vpop.f32.mrf.mxu0
    %v1138 = vadd.f32 0.0, %v1137
    %v1139 = vpop.f32.mrf.mxu0
    %1140 = vdwg.mxu0
    %v1141 = vld [vmem:[%s12] sm:$0x1]
    %v1142 = vlaneseq
    %v1143 = vshrl.u32 %v1142, 7
    %v1144 = vsub.s32 0, %v1143
    %v1145 = vrot.slane %v1141, %v1144
    %vm1146 = vcmp.eq.s32.totalorder %v216, %v1145
    %vm1147 = vcmp.eq.s32.totalorder %v217, %v1145
    %v1148 = vsel %vm1146, 1, 0
    %v1149 = vsel %vm1147, 1, 0
    %v1150 = vcvt.s32.f32 %v1148
    %v1151 = vcvt.s32.f32 %v1149
    %vm1152 = vcmask 146432
    %v1154 = vsel %vm1152, %v1150, 0
    %v1157 = vsel %vm1152, %v1151, 0
    %v1160 = vsel %vm847, %v1138, 0
    %1162 = vmatprep.subr.mxu0 0.0
    %1163 = vmatpush1.msra.mxu0 0.0
    %1164 = vmatprep.subr.mxu0 0.0
    %1165 = vmatpush1.msra.mxu0 0.0
    %1166 = vmatprep.subr.mxu0 0.0
    %1167 = vmatpush1.msra.mxu0 0.0
    %1168 = vmatprep.subr.mxu0 0.0
    %1169 = vmatpush1.msra.mxu0 0.0
    %1170 = vmatprep.subr.mxu0 0.0
    %1171 = vmatpush1.msra.mxu0 0.0
    %1172 = vmatprep.subr.mxu0 0.0
    %1173 = vmatpush1.msra.mxu0 0.0
    %1174 = vmatprep.subr.mxu0 0.0
    %1175 = vmatpush1.msra.mxu0 0.0
    %1176 = vmatprep.subr.mxu0 0.0
    %1177 = vmatpush1.msra.mxu0 0.0
    %1178 = vmatprep.subr.mxu0 0.0
    %1179 = vmatpush1.msra.mxu0 0.0
    %1180 = vmatprep.subr.mxu0 0.0
    %1181 = vmatpush1.msra.mxu0 0.0
    %1182 = vmatprep.subr.mxu0 0.0
    %1183 = vmatpush1.msra.mxu0 0.0
    %1184 = vmatprep.subr.mxu0 0.0
    %1185 = vmatpush1.msra.mxu0 0.0
    %1186 = vmatprep.subr.mxu0 0.0
    %1187 = vmatpush1.msra.mxu0 0.0
    %1188 = vmatprep.subr.mxu0 0.0
    %1189 = vmatpush1.msra.mxu0 %v1160
    %1190 = vmatprep.subr.mxu0 0.0
    %1191 = vmatpush1.msra.mxu0 %v1133
    %1192 = vmatprep.subr.mxu0 0.0
    %1193 = vmatpush1.msra.mxu0 %v1128
    %1194 = vmatprep.subr.mxu0 0.0
    %1195 = vmatpush2.msra.mxu0 0.0
    %1196 = vmatprep.subr.mxu0 0.0
    %1197 = vmatpush2.msra.mxu0 0.0
    %1198 = vmatprep.subr.mxu0 0.0
    %1199 = vmatpush2.msra.mxu0 0.0
    %1200 = vmatprep.subr.mxu0 0.0
    %1201 = vmatpush2.msra.mxu0 0.0
    %1202 = vmatprep.subr.mxu0 0.0
    %1203 = vmatpush2.msra.mxu0 0.0
    %1204 = vmatprep.subr.mxu0 0.0
    %1205 = vmatpush2.msra.mxu0 0.0
    %1206 = vmatprep.subr.mxu0 0.0
    %1207 = vmatpush2.msra.mxu0 0.0
    %1208 = vmatprep.subr.mxu0 0.0
    %1209 = vmatpush2.msra.mxu0 0.0
    %1210 = vmatprep.subr.mxu0 0.0
    %1211 = vmatpush2.msra.mxu0 0.0
    %1212 = vmatprep.subr.mxu0 0.0
    %1213 = vmatpush2.msra.mxu0 0.0
    %1214 = vmatprep.subr.mxu0 0.0
    %1215 = vmatpush2.msra.mxu0 0.0
    %1216 = vmatprep.subr.mxu0 0.0
    %1217 = vmatpush2.msra.mxu0 0.0
    %1218 = vmatprep.subr.mxu0 0.0
    %1219 = vmatpush2.msra.mxu0 0.0
    %1220 = vmatprep.subr.mxu0 0.0
    %1221 = vmatpush2.msra.mxu0 0.0
    %1222 = vmatprep.subr.mxu0 0.0
    %1223 = vmatpush2.msra.mxu0 0.0
    %1224 = vmatprep.subr.mxu0 0.0
    %1225 = vmatpush2.msra.mxu0 0.0
    %1226 = vmatprep.mubr.f32.mxu0 0.0
    %1227 = vmatmul.mubr.f32.gmra.mxu0 %v1154
    %v1228 = vpop.f32.mrf.mxu0
    %v1229 = vadd.f32 0.0, %v1228
    %v1230 = vpop.f32.mrf.mxu0
    %1231 = vmatprep.mubr.f32.mxu0 0.0
    %1232 = vmatmul.mubr.f32.gmra.mxu0 %v1157
    %v1233 = vpop.f32.mrf.mxu0
    %v1234 = vadd.f32 0.0, %v1233
    %v1235 = vpop.f32.mrf.mxu0
    %1236 = vdwg.mxu0
    %v1237 = vmax.f32 %v1229, 1.0
    %v1238 = vmax.f32 %v1234, 1.0
    %1240 = vset.pattern.permute.xlu0 32
    %1241 = vperm.xlu0 %1240, %v1237
    %v1242 = vpop.permute.xlu0 %1241
    %1245 = vset.pattern.permute.xlu0 32
    %1246 = vperm.xlu0 %1245, %v1238
    %v1247 = vpop.permute.xlu0 %1246
    %v1249 = vrcp.pop %v1242
    %v1250 = vmul.f32 %v1229, %v1249
    %v1251 = vrcp.pop %v1247
    %v1252 = vmul.f32 %v1234, %v1251
    %v1253 = vadd.f32 %v1250, %v73
    %v1254 = vadd.f32 %v1252, %v74
    %v1255 = vmul.f32 %v1253, 0.5
    %v1256 = vmul.f32 %v1254, 0.5
    %v1257 = vsel %vm211, %v1255, 1.0
    %v1258 = vsel %vm211, %v1256, 1.0
    %v1260 = vsel %vm847, %v1258, 0
    %1262 = vmatprep.subr.mxu0 0.0
    %1263 = vmatpush1.msra.mxu0 0.0
    %1264 = vmatprep.subr.mxu0 0.0
    %1265 = vmatpush1.msra.mxu0 0.0
    %1266 = vmatprep.subr.mxu0 0.0
    %1267 = vmatpush1.msra.mxu0 0.0
    %1268 = vmatprep.subr.mxu0 0.0
    %1269 = vmatpush1.msra.mxu0 0.0
    %1270 = vmatprep.subr.mxu0 0.0
    %1271 = vmatpush1.msra.mxu0 0.0
    %1272 = vmatprep.subr.mxu0 0.0
    %1273 = vmatpush1.msra.mxu0 0.0
    %1274 = vmatprep.subr.mxu0 0.0
    %1275 = vmatpush1.msra.mxu0 0.0
    %1276 = vmatprep.subr.mxu0 0.0
    %1277 = vmatpush1.msra.mxu0 0.0
    %1278 = vmatprep.subr.mxu0 0.0
    %1279 = vmatpush1.msra.mxu0 0.0
    %1280 = vmatprep.subr.mxu0 0.0
    %1281 = vmatpush1.msra.mxu0 0.0
    %1282 = vmatprep.subr.mxu0 0.0
    %1283 = vmatpush1.msra.mxu0 0.0
    %1284 = vmatprep.subr.mxu0 0.0
    %1285 = vmatpush1.msra.mxu0 0.0
    %1286 = vmatprep.subr.mxu0 0.0
    %1287 = vmatpush1.msra.mxu0 0.0
    %1288 = vmatprep.subr.mxu0 0.0
    %1289 = vmatpush1.msra.mxu0 0.0
    %1290 = vmatprep.subr.mxu0 0.0
    %1291 = vmatpush1.msra.mxu0 %v1260
    %1292 = vmatprep.subr.mxu0 0.0
    %1293 = vmatpush1.msra.mxu0 %v1257
    %1294 = vmatprep.subr.mxu0 0.0
    %1295 = vmatpush2.msra.mxu0 0.0
    %1296 = vmatprep.subr.mxu0 0.0
    %1297 = vmatpush2.msra.mxu0 0.0
    %1298 = vmatprep.subr.mxu0 0.0
    %1299 = vmatpush2.msra.mxu0 0.0
    %1300 = vmatprep.subr.mxu0 0.0
    %1301 = vmatpush2.msra.mxu0 0.0
    %1302 = vmatprep.subr.mxu0 0.0
    %1303 = vmatpush2.msra.mxu0 0.0
    %1304 = vmatprep.subr.mxu0 0.0
    %1305 = vmatpush2.msra.mxu0 0.0
    %1306 = vmatprep.subr.mxu0 0.0
    %1307 = vmatpush2.msra.mxu0 0.0
    %1308 = vmatprep.subr.mxu0 0.0
    %1309 = vmatpush2.msra.mxu0 0.0
    %1310 = vmatprep.subr.mxu0 0.0
    %1311 = vmatpush2.msra.mxu0 0.0
    %1312 = vmatprep.subr.mxu0 0.0
    %1313 = vmatpush2.msra.mxu0 0.0
    %1314 = vmatprep.subr.mxu0 0.0
    %1315 = vmatpush2.msra.mxu0 0.0
    %1316 = vmatprep.subr.mxu0 0.0
    %1317 = vmatpush2.msra.mxu0 0.0
    %1318 = vmatprep.subr.mxu0 0.0
    %1319 = vmatpush2.msra.mxu0 0.0
    %1320 = vmatprep.subr.mxu0 0.0
    %1321 = vmatpush2.msra.mxu0 0.0
    %1322 = vmatprep.subr.mxu0 0.0
    %1323 = vmatpush2.msra.mxu0 0.0
    %1324 = vmatprep.subr.mxu0 0.0
    %1325 = vmatpush2.msra.mxu0 0.0
    %1326 = vmatprep.mubr.f32.mxu0 0.0
    %1327 = vmatmul.mubr.f32.gmra.mxu0 %v839
    %v1328 = vpop.f32.mrf.mxu0
    %v1329 = vadd.f32 0.0, %v1328
    %v1330 = vpop.f32.mrf.mxu0
    %1331 = vmatprep.mubr.f32.mxu0 0.0
    %1332 = vmatmul.mubr.f32.gmra.mxu0 %v842
    %v1333 = vpop.f32.mrf.mxu0
    %v1334 = vadd.f32 0.0, %v1333
    %v1335 = vpop.f32.mrf.mxu0
    %1336 = vmatprep.mubr.f32.mxu0 0.0
    %1337 = vmatmul.mubr.f32.gmra.mxu0 %v845
    %v1338 = vpop.f32.mrf.mxu0
    %v1339 = vadd.f32 0.0, %v1338
    %v1340 = vpop.f32.mrf.mxu0
    %1341 = vdwg.mxu0
    %v1342 = vmul.f32 %v1329, %v669
    %v1343 = vmul.f32 %v1334, %v674
    %v1344 = vmul.f32 %v1339, %v679
    %v1345 = vsel %vm211, %v1342, %v1329
    %v1346 = vsel %vm211, %v1343, %v1334
    %v1347 = vsel %vm211, %v1344, %v1339
    %v1349 = vsel %vm375, %v1347, 0
    %1351 = vmatprep.subr.mxu0 0.0
    %1352 = vmatpush1.msra.mxu0 0.0
    %1353 = vmatprep.subr.mxu0 0.0
    %1354 = vmatpush1.msra.mxu0 0.0
    %1355 = vmatprep.subr.mxu0 0.0
    %1356 = vmatpush1.msra.mxu0 0.0
    %1357 = vmatprep.subr.mxu0 0.0
    %1358 = vmatpush1.msra.mxu0 0.0
    %1359 = vmatprep.subr.mxu0 0.0
    %1360 = vmatpush1.msra.mxu0 0.0
    %1361 = vmatprep.subr.mxu0 0.0
    %1362 = vmatpush1.msra.mxu0 0.0
    %1363 = vmatprep.subr.mxu0 0.0
    %1364 = vmatpush1.msra.mxu0 0.0
    %1365 = vmatprep.subr.mxu0 0.0
    %1366 = vmatpush1.msra.mxu0 0.0
    %1367 = vmatprep.subr.mxu0 0.0
    %1368 = vmatpush1.msra.mxu0 0.0
    %1369 = vmatprep.subr.mxu0 0.0
    %1370 = vmatpush1.msra.mxu0 0.0
    %1371 = vmatprep.subr.mxu0 0.0
    %1372 = vmatpush1.msra.mxu0 0.0
    %1373 = vmatprep.subr.mxu0 0.0
    %1374 = vmatpush1.msra.mxu0 0.0
    %1375 = vmatprep.subr.mxu0 0.0
    %1376 = vmatpush1.msra.mxu0 0.0
    %1377 = vmatprep.subr.mxu0 0.0
    %1378 = vmatpush1.msra.mxu0 %v1349
    %1379 = vmatprep.subr.mxu0 0.0
    %1380 = vmatpush1.msra.mxu0 %v1346
    %1381 = vmatprep.subr.mxu0 0.0
    %1382 = vmatpush1.msra.mxu0 %v1345
    %1383 = vmatprep.subr.mxu0 0.0
    %1384 = vmatpush2.msra.mxu0 0.0
    %1385 = vmatprep.subr.mxu0 0.0
    %1386 = vmatpush2.msra.mxu0 0.0
    %1387 = vmatprep.subr.mxu0 0.0
    %1388 = vmatpush2.msra.mxu0 0.0
    %1389 = vmatprep.subr.mxu0 0.0
    %1390 = vmatpush2.msra.mxu0 0.0
    %1391 = vmatprep.subr.mxu0 0.0
    %1392 = vmatpush2.msra.mxu0 0.0
    %1393 = vmatprep.subr.mxu0 0.0
    %1394 = vmatpush2.msra.mxu0 0.0
    %1395 = vmatprep.subr.mxu0 0.0
    %1396 = vmatpush2.msra.mxu0 0.0
    %1397 = vmatprep.subr.mxu0 0.0
    %1398 = vmatpush2.msra.mxu0 0.0
    %1399 = vmatprep.subr.mxu0 0.0
    %1400 = vmatpush2.msra.mxu0 0.0
    %1401 = vmatprep.subr.mxu0 0.0
    %1402 = vmatpush2.msra.mxu0 0.0
    %1403 = vmatprep.subr.mxu0 0.0
    %1404 = vmatpush2.msra.mxu0 0.0
    %1405 = vmatprep.subr.mxu0 0.0
    %1406 = vmatpush2.msra.mxu0 0.0
    %1407 = vmatprep.subr.mxu0 0.0
    %1408 = vmatpush2.msra.mxu0 0.0
    %1409 = vmatprep.subr.mxu0 0.0
    %1410 = vmatpush2.msra.mxu0 0.0
    %1411 = vmatprep.subr.mxu0 0.0
    %1412 = vmatpush2.msra.mxu0 0.0
    %1413 = vmatprep.subr.mxu0 0.0
    %1414 = vmatpush2.msra.mxu0 0.0
    %1415 = vmatprep.mubr.f32.mxu0 0.0
    %1416 = vmatmul.mubr.f32.gmra.mxu0 %v932
    %v1417 = vpop.f32.mrf.mxu0
    %v1418 = vadd.f32 0.0, %v1417
    %v1419 = vpop.f32.mrf.mxu0
    %1420 = vmatprep.mubr.f32.mxu0 0.0
    %1421 = vmatmul.mubr.f32.gmra.mxu0 %v935
    %v1422 = vpop.f32.mrf.mxu0
    %v1423 = vadd.f32 0.0, %v1422
    %v1424 = vpop.f32.mrf.mxu0
    %1425 = vdwg.mxu0
    %v1426 = vmax.f32 %v1418, 1.0
    %v1427 = vmax.f32 %v1423, 1.0
    %1429 = vset.pattern.permute.xlu0 32
    %1430 = vperm.xlu0 %1429, %v1426
    %v1431 = vpop.permute.xlu0 %1430
    %1434 = vset.pattern.permute.xlu0 32
    %1435 = vperm.xlu0 %1434, %v1427
    %v1436 = vpop.permute.xlu0 %1435
    %v1438 = vrcp.pop %v1431
    %v1439 = vmul.f32 %v1418, %v1438
    %v1440 = vrcp.pop %v1436
    %v1441 = vmul.f32 %v1423, %v1440
    %v1442 = vld [vmem:[%s15] sm:$0xff]
    %v1443 = vld [vmem:[%s15 + $0x8] sm:$0xff]
    %v1444 = vld [vmem:[%s15 + $0x10] sm:$0xff]
    %v1445 = vld [vmem:[%s15 + $0x18] sm:$0xff]
    %v1446 = vld [vmem:[%s15 + $0x20] sm:$0x1]
    %v1447 = vld [vmem:[%s16] sm:$0xff]
    %v1448 = vld [vmem:[%s16 + $0x8] sm:$0xff]
    %v1449 = vld [vmem:[%s16 + $0x10] sm:$0xff]
    %v1450 = vld [vmem:[%s16 + $0x18] sm:$0xff]
    %v1451 = vld [vmem:[%s16 + $0x20] sm:$0x1]
    %vm1452 = vcmask 269312
    %v1454 = vsel %vm1452, %v1028, 0
    %v1457 = vsel %vm1452, %v1030, 0
    %vm1459 = vcmask 1040384
    %v1461 = vsel %vm1459, %v1451, 0
    %1463 = vmatprep.subr.mxu0 0.0
    %1464 = vmatpush1.msra.mxu0 0.0
    %1465 = vmatprep.subr.mxu0 0.0
    %1466 = vmatpush1.msra.mxu0 0.0
    %1467 = vmatprep.subr.mxu0 0.0
    %1468 = vmatpush1.msra.mxu0 0.0
    %1469 = vmatprep.subr.mxu0 0.0
    %1470 = vmatpush1.msra.mxu0 0.0
    %1471 = vmatprep.subr.mxu0 0.0
    %1472 = vmatpush1.msra.mxu0 0.0
    %1473 = vmatprep.subr.mxu0 0.0
    %1474 = vmatpush1.msra.mxu0 0.0
    %1475 = vmatprep.subr.mxu0 0.0
    %1476 = vmatpush1.msra.mxu0 0.0
    %1477 = vmatprep.subr.mxu0 0.0
    %1478 = vmatpush1.msra.mxu0 0.0
    %1479 = vmatprep.subr.mxu0 0.0
    %1480 = vmatpush1.msra.mxu0 0.0
    %1481 = vmatprep.subr.mxu0 0.0
    %1482 = vmatpush1.msra.mxu0 0.0
    %1483 = vmatprep.subr.mxu0 0.0
    %1484 = vmatpush1.msra.mxu0 0.0
    %1485 = vmatprep.subr.mxu0 0.0
    %1486 = vmatpush1.msra.mxu0 %v1461
    %1487 = vmatprep.subr.mxu0 0.0
    %1488 = vmatpush1.msra.mxu0 %v1450
    %1489 = vmatprep.subr.mxu0 0.0
    %1490 = vmatpush1.msra.mxu0 %v1449
    %1491 = vmatprep.subr.mxu0 0.0
    %1492 = vmatpush1.msra.mxu0 %v1448
    %1493 = vmatprep.subr.mxu0 0.0
    %1494 = vmatpush1.msra.mxu0 %v1447
    %1495 = vmatprep.subr.mxu0 0.0
    %1496 = vmatpush2.msra.mxu0 0.0
    %1497 = vmatprep.subr.mxu0 0.0
    %1498 = vmatpush2.msra.mxu0 0.0
    %1499 = vmatprep.subr.mxu0 0.0
    %1500 = vmatpush2.msra.mxu0 0.0
    %1501 = vmatprep.subr.mxu0 0.0
    %1502 = vmatpush2.msra.mxu0 0.0
    %1503 = vmatprep.subr.mxu0 0.0
    %1504 = vmatpush2.msra.mxu0 0.0
    %1505 = vmatprep.subr.mxu0 0.0
    %1506 = vmatpush2.msra.mxu0 0.0
    %1507 = vmatprep.subr.mxu0 0.0
    %1508 = vmatpush2.msra.mxu0 0.0
    %1509 = vmatprep.subr.mxu0 0.0
    %1510 = vmatpush2.msra.mxu0 0.0
    %1511 = vmatprep.subr.mxu0 0.0
    %1512 = vmatpush2.msra.mxu0 0.0
    %1513 = vmatprep.subr.mxu0 0.0
    %1514 = vmatpush2.msra.mxu0 0.0
    %1515 = vmatprep.subr.mxu0 0.0
    %1516 = vmatpush2.msra.mxu0 0.0
    %1517 = vmatprep.subr.mxu0 0.0
    %1518 = vmatpush2.msra.mxu0 0.0
    %1519 = vmatprep.subr.mxu0 0.0
    %1520 = vmatpush2.msra.mxu0 0.0
    %1521 = vmatprep.subr.mxu0 0.0
    %1522 = vmatpush2.msra.mxu0 0.0
    %1523 = vmatprep.subr.mxu0 0.0
    %1524 = vmatpush2.msra.mxu0 0.0
    %1525 = vmatprep.subr.mxu0 0.0
    %1526 = vmatpush2.msra.mxu0 0.0
    %1527 = vmatprep.mubr.f32.mxu0 0.0
    %1528 = vmatmul.mubr.f32.gmra.mxu0 %v1454
    %v1529 = vpop.f32.mrf.mxu0
    %v1530 = vadd.f32 0.0, %v1529
    %v1531 = vpop.f32.mrf.mxu0
    %1532 = vmatprep.mubr.f32.mxu0 0.0
    %1533 = vmatmul.mubr.f32.gmra.mxu0 %v1457
    %v1534 = vpop.f32.mrf.mxu0
    %v1535 = vadd.f32 0.0, %v1534
    %v1536 = vpop.f32.mrf.mxu0
    %1537 = vdwg.mxu0
    %v1539 = vsel %vm1452, %v553, 0
    %v1542 = vsel %vm1452, %v555, 0
    %v1545 = vsel %vm1459, %v1446, 0
    %1547 = vmatprep.subr.mxu0 0.0
    %1548 = vmatpush1.msra.mxu0 0.0
    %1549 = vmatprep.subr.mxu0 0.0
    %1550 = vmatpush1.msra.mxu0 0.0
    %1551 = vmatprep.subr.mxu0 0.0
    %1552 = vmatpush1.msra.mxu0 0.0
    %1553 = vmatprep.subr.mxu0 0.0
    %1554 = vmatpush1.msra.mxu0 0.0
    %1555 = vmatprep.subr.mxu0 0.0
    %1556 = vmatpush1.msra.mxu0 0.0
    %1557 = vmatprep.subr.mxu0 0.0
    %1558 = vmatpush1.msra.mxu0 0.0
    %1559 = vmatprep.subr.mxu0 0.0
    %1560 = vmatpush1.msra.mxu0 0.0
    %1561 = vmatprep.subr.mxu0 0.0
    %1562 = vmatpush1.msra.mxu0 0.0
    %1563 = vmatprep.subr.mxu0 0.0
    %1564 = vmatpush1.msra.mxu0 0.0
    %1565 = vmatprep.subr.mxu0 0.0
    %1566 = vmatpush1.msra.mxu0 0.0
    %1567 = vmatprep.subr.mxu0 0.0
    %1568 = vmatpush1.msra.mxu0 0.0
    %1569 = vmatprep.subr.mxu0 0.0
    %1570 = vmatpush1.msra.mxu0 %v1545
    %1571 = vmatprep.subr.mxu0 0.0
    %1572 = vmatpush1.msra.mxu0 %v1445
    %1573 = vmatprep.subr.mxu0 0.0
    %1574 = vmatpush1.msra.mxu0 %v1444
    %1575 = vmatprep.subr.mxu0 0.0
    %1576 = vmatpush1.msra.mxu0 %v1443
    %1577 = vmatprep.subr.mxu0 0.0
    %1578 = vmatpush1.msra.mxu0 %v1442
    %1579 = vmatprep.subr.mxu0 0.0
    %1580 = vmatpush2.msra.mxu0 0.0
    %1581 = vmatprep.subr.mxu0 0.0
    %1582 = vmatpush2.msra.mxu0 0.0
    %1583 = vmatprep.subr.mxu0 0.0
    %1584 = vmatpush2.msra.mxu0 0.0
    %1585 = vmatprep.subr.mxu0 0.0
    %1586 = vmatpush2.msra.mxu0 0.0
    %1587 = vmatprep.subr.mxu0 0.0
    %1588 = vmatpush2.msra.mxu0 0.0
    %1589 = vmatprep.subr.mxu0 0.0
    %1590 = vmatpush2.msra.mxu0 0.0
    %1591 = vmatprep.subr.mxu0 0.0
    %1592 = vmatpush2.msra.mxu0 0.0
    %1593 = vmatprep.subr.mxu0 0.0
    %1594 = vmatpush2.msra.mxu0 0.0
    %1595 = vmatprep.subr.mxu0 0.0
    %1596 = vmatpush2.msra.mxu0 0.0
    %1597 = vmatprep.subr.mxu0 0.0
    %1598 = vmatpush2.msra.mxu0 0.0
    %1599 = vmatprep.subr.mxu0 0.0
    %1600 = vmatpush2.msra.mxu0 0.0
    %1601 = vmatprep.subr.mxu0 0.0
    %1602 = vmatpush2.msra.mxu0 0.0
    %1603 = vmatprep.subr.mxu0 0.0
    %1604 = vmatpush2.msra.mxu0 0.0
    %1605 = vmatprep.subr.mxu0 0.0
    %1606 = vmatpush2.msra.mxu0 0.0
    %1607 = vmatprep.subr.mxu0 0.0
    %1608 = vmatpush2.msra.mxu0 0.0
    %1609 = vmatprep.subr.mxu0 0.0
    %1610 = vmatpush2.msra.mxu0 0.0
    %1611 = vmatprep.mubr.f32.mxu0 0.0
    %1612 = vmatmul.mubr.f32.gmra.mxu0 %v1539
    %v1613 = vpop.f32.mrf.mxu0
    %v1614 = vadd.f32 %v1530, %v1613
    %v1615 = vpop.f32.mrf.mxu0
    %1616 = vmatprep.mubr.f32.mxu0 0.0
    %1617 = vmatmul.mubr.f32.gmra.mxu0 %v1542
    %v1618 = vpop.f32.mrf.mxu0
    %v1619 = vadd.f32 %v1535, %v1618
    %v1620 = vpop.f32.mrf.mxu0
    %1621 = vdwg.mxu0
    %v1622 = vld [vmem:[%s17] sm:$0xff]
    %v1623 = vld [vmem:[%s17 + $0x8] sm:$0xff]
    %v1624 = vld [vmem:[%s17 + $0x10] sm:$0xff]
    %v1625 = vld [vmem:[%s17 + $0x18] sm:$0xff]
    %v1626 = vld [vmem:[%s17 + $0x20] sm:$0x1]
    %v1628 = vsel %vm1452, %v1439, 0
    %v1631 = vsel %vm1452, %v1441, 0
    %v1634 = vsel %vm1459, %v1626, 0
    %1636 = vmatprep.subr.mxu0 0.0
    %1637 = vmatpush1.msra.mxu0 0.0
    %1638 = vmatprep.subr.mxu0 0.0
    %1639 = vmatpush1.msra.mxu0 0.0
    %1640 = vmatprep.subr.mxu0 0.0
    %1641 = vmatpush1.msra.mxu0 0.0
    %1642 = vmatprep.subr.mxu0 0.0
    %1643 = vmatpush1.msra.mxu0 0.0
    %1644 = vmatprep.subr.mxu0 0.0
    %1645 = vmatpush1.msra.mxu0 0.0
    %1646 = vmatprep.subr.mxu0 0.0
    %1647 = vmatpush1.msra.mxu0 0.0
    %1648 = vmatprep.subr.mxu0 0.0
    %1649 = vmatpush1.msra.mxu0 0.0
    %1650 = vmatprep.subr.mxu0 0.0
    %1651 = vmatpush1.msra.mxu0 0.0
    %1652 = vmatprep.subr.mxu0 0.0
    %1653 = vmatpush1.msra.mxu0 0.0
    %1654 = vmatprep.subr.mxu0 0.0
    %1655 = vmatpush1.msra.mxu0 0.0
    %1656 = vmatprep.subr.mxu0 0.0
    %1657 = vmatpush1.msra.mxu0 0.0
    %1658 = vmatprep.subr.mxu0 0.0
    %1659 = vmatpush1.msra.mxu0 %v1634
    %1660 = vmatprep.subr.mxu0 0.0
    %1661 = vmatpush1.msra.mxu0 %v1625
    %1662 = vmatprep.subr.mxu0 0.0
    %1663 = vmatpush1.msra.mxu0 %v1624
    %1664 = vmatprep.subr.mxu0 0.0
    %1665 = vmatpush1.msra.mxu0 %v1623
    %1666 = vmatprep.subr.mxu0 0.0
    %1667 = vmatpush1.msra.mxu0 %v1622
    %1668 = vmatprep.subr.mxu0 0.0
    %1669 = vmatpush2.msra.mxu0 0.0
    %1670 = vmatprep.subr.mxu0 0.0
    %1671 = vmatpush2.msra.mxu0 0.0
    %1672 = vmatprep.subr.mxu0 0.0
    %1673 = vmatpush2.msra.mxu0 0.0
    %1674 = vmatprep.subr.mxu0 0.0
    %1675 = vmatpush2.msra.mxu0 0.0
    %1676 = vmatprep.subr.mxu0 0.0
    %1677 = vmatpush2.msra.mxu0 0.0
    %1678 = vmatprep.subr.mxu0 0.0
    %1679 = vmatpush2.msra.mxu0 0.0
    %1680 = vmatprep.subr.mxu0 0.0
    %1681 = vmatpush2.msra.mxu0 0.0
    %1682 = vmatprep.subr.mxu0 0.0
    %1683 = vmatpush2.msra.mxu0 0.0
    %1684 = vmatprep.subr.mxu0 0.0
    %1685 = vmatpush2.msra.mxu0 0.0
    %1686 = vmatprep.subr.mxu0 0.0
    %1687 = vmatpush2.msra.mxu0 0.0
    %1688 = vmatprep.subr.mxu0 0.0
    %1689 = vmatpush2.msra.mxu0 0.0
    %1690 = vmatprep.subr.mxu0 0.0
    %1691 = vmatpush2.msra.mxu0 0.0
    %1692 = vmatprep.subr.mxu0 0.0
    %1693 = vmatpush2.msra.mxu0 0.0
    %1694 = vmatprep.subr.mxu0 0.0
    %1695 = vmatpush2.msra.mxu0 0.0
    %1696 = vmatprep.subr.mxu0 0.0
    %1697 = vmatpush2.msra.mxu0 0.0
    %1698 = vmatprep.subr.mxu0 0.0
    %1699 = vmatpush2.msra.mxu0 0.0
    %1700 = vmatprep.mubr.f32.mxu0 0.0
    %1701 = vmatmul.mubr.f32.gmra.mxu0 %v1628
    %v1702 = vpop.f32.mrf.mxu0
    %v1703 = vadd.f32 0.0, %v1702
    %v1704 = vpop.f32.mrf.mxu0
    %1705 = vmatprep.mubr.f32.mxu0 0.0
    %1706 = vmatmul.mubr.f32.gmra.mxu0 %v1631
    %v1707 = vpop.f32.mrf.mxu0
    %v1708 = vadd.f32 0.0, %v1707
    %v1709 = vpop.f32.mrf.mxu0
    %1710 = vdwg.mxu0
    %v1711 = vadd.f32 %v1614, %v1703
    %v1712 = vadd.f32 %v1619, %v1708
    %v1713 = vld [vmem:[%s18] sm:$0x1]
    %v1715 = vlaneseq
    %v1716 = vshrl.u32 %v1715, 7
    %v1717 = vsub.s32 0, %v1716
    %v1718 = vrot.slane %v1713, %v1717
    %v1720 = vadd.f32 %v1711, %v1718
    %v1721 = vadd.f32 %v1712, %v1718
    %v1722 = vmax.f32 %v1720, 0.0
    %v1723 = vmax.f32 %v1721, 0.0
    %v1724 = vld [vmem:[%s19] sm:$0xff]
    %v1725 = vld [vmem:[%s19 + $0x8] sm:$0xff]
    %v1726 = vld [vmem:[%s19 + $0x10] sm:$0xff]
    %v1727 = vld [vmem:[%s19 + $0x18] sm:$0xff]
    %v1728 = vld [vmem:[%s19 + $0x20] sm:$0xff]
    %v1729 = vld [vmem:[%s19 + $0x28] sm:$0xff]
    %v1730 = vld [vmem:[%s19 + $0x30] sm:$0xff]
    %v1731 = vld [vmem:[%s19 + $0x38] sm:$0xff]
    %v1732 = vld [vmem:[%s19 + $0x40] sm:$0xff]
    %v1733 = vld [vmem:[%s19 + $0x48] sm:$0xff]
    %v1734 = vld [vmem:[%s19 + $0x50] sm:$0xff]
    %v1735 = vld [vmem:[%s19 + $0x58] sm:$0xff]
    %vm1736 = vcmask 785408
    %v1738 = vsel %vm1736, %v1722, 0
    %v1741 = vsel %vm1736, %v1723, 0
    %1743 = vmatprep.subr.mxu0 0.0
    %1744 = vmatpush1.msra.mxu0 0.0
    %1745 = vmatprep.subr.mxu0 0.0
    %1746 = vmatpush1.msra.mxu0 0.0
    %1747 = vmatprep.subr.mxu0 0.0
    %1748 = vmatpush1.msra.mxu0 0.0
    %1749 = vmatprep.subr.mxu0 0.0
    %1750 = vmatpush1.msra.mxu0 0.0
    %1751 = vmatprep.subr.mxu0 0.0
    %1752 = vmatpush1.msra.mxu0 %v1735
    %1753 = vmatprep.subr.mxu0 0.0
    %1754 = vmatpush1.msra.mxu0 %v1734
    %1755 = vmatprep.subr.mxu0 0.0
    %1756 = vmatpush1.msra.mxu0 %v1733
    %1757 = vmatprep.subr.mxu0 0.0
    %1758 = vmatpush1.msra.mxu0 %v1732
    %1759 = vmatprep.subr.mxu0 0.0
    %1760 = vmatpush1.msra.mxu0 %v1731
    %1761 = vmatprep.subr.mxu0 0.0
    %1762 = vmatpush1.msra.mxu0 %v1730
    %1763 = vmatprep.subr.mxu0 0.0
    %1764 = vmatpush1.msra.mxu0 %v1729
    %1765 = vmatprep.subr.mxu0 0.0
    %1766 = vmatpush1.msra.mxu0 %v1728
    %1767 = vmatprep.subr.mxu0 0.0
    %1768 = vmatpush1.msra.mxu0 %v1727
    %1769 = vmatprep.subr.mxu0 0.0
    %1770 = vmatpush1.msra.mxu0 %v1726
    %1771 = vmatprep.subr.mxu0 0.0
    %1772 = vmatpush1.msra.mxu0 %v1725
    %1773 = vmatprep.subr.mxu0 0.0
    %1774 = vmatpush1.msra.mxu0 %v1724
    %1775 = vmatprep.subr.mxu0 0.0
    %1776 = vmatpush2.msra.mxu0 0.0
    %1777 = vmatprep.subr.mxu0 0.0
    %1778 = vmatpush2.msra.mxu0 0.0
    %1779 = vmatprep.subr.mxu0 0.0
    %1780 = vmatpush2.msra.mxu0 0.0
    %1781 = vmatprep.subr.mxu0 0.0
    %1782 = vmatpush2.msra.mxu0 0.0
    %1783 = vmatprep.subr.mxu0 0.0
    %1784 = vmatpush2.msra.mxu0 0.0
    %1785 = vmatprep.subr.mxu0 0.0
    %1786 = vmatpush2.msra.mxu0 0.0
    %1787 = vmatprep.subr.mxu0 0.0
    %1788 = vmatpush2.msra.mxu0 0.0
    %1789 = vmatprep.subr.mxu0 0.0
    %1790 = vmatpush2.msra.mxu0 0.0
    %1791 = vmatprep.subr.mxu0 0.0
    %1792 = vmatpush2.msra.mxu0 0.0
    %1793 = vmatprep.subr.mxu0 0.0
    %1794 = vmatpush2.msra.mxu0 0.0
    %1795 = vmatprep.subr.mxu0 0.0
    %1796 = vmatpush2.msra.mxu0 0.0
    %1797 = vmatprep.subr.mxu0 0.0
    %1798 = vmatpush2.msra.mxu0 0.0
    %1799 = vmatprep.subr.mxu0 0.0
    %1800 = vmatpush2.msra.mxu0 0.0
    %1801 = vmatprep.subr.mxu0 0.0
    %1802 = vmatpush2.msra.mxu0 0.0
    %1803 = vmatprep.subr.mxu0 0.0
    %1804 = vmatpush2.msra.mxu0 0.0
    %1805 = vmatprep.subr.mxu0 0.0
    %1806 = vmatpush2.msra.mxu0 0.0
    %1807 = vmatprep.mubr.f32.mxu0 0.0
    %1808 = vmatmul.mubr.f32.gmra.mxu0 %v1738
    %v1809 = vpop.f32.mrf.mxu0
    %v1810 = vadd.f32 0.0, %v1809
    %v1811 = vpop.f32.mrf.mxu0
    %1812 = vmatprep.mubr.f32.mxu0 0.0
    %1813 = vmatmul.mubr.f32.gmra.mxu0 %v1741
    %v1814 = vpop.f32.mrf.mxu0
    %v1815 = vadd.f32 0.0, %v1814
    %v1816 = vpop.f32.mrf.mxu0
    %1817 = vdwg.mxu0
    %1820 = vrot.lane.b32.xlu0 %v1810, 127
    %v1821 = vpop.permute.xlu0 %1820
    %1822 = vrot.lane.b32.xlu0 %v1815, 127
    %v1823 = vpop.permute.xlu0 %1822
    %v1826 = vmax.f32 %v1810, %v1821
    %v1827 = vmax.f32 %v1815, %v1823
    %1828 = vrot.lane.b32.xlu0 %v1810, 126
    %v1829 = vpop.permute.xlu0 %1828
    %1830 = vrot.lane.b32.xlu0 %v1815, 126
    %v1831 = vpop.permute.xlu0 %1830
    %v1834 = vmax.f32 %v1826, %v1829
    %v1835 = vmax.f32 %v1827, %v1831
    %v1836 = vsub.f32 %v1810, %v1834
    %v1837 = vsub.f32 %v1815, %v1835
    %v1838 = vmul.f32 %v1836, 1.442695
    %v1839 = vpow.pop %v1838
    %v1840 = vmul.f32 %v1837, 1.442695
    %v1841 = vpow.pop %v1840
    %1844 = vrot.lane.b32.xlu0 %v1834, 1
    %v1845 = vpop.permute.xlu0 %1844
    %1846 = vrot.lane.b32.xlu0 %v1835, 1
    %v1847 = vpop.permute.xlu0 %1846
    %v1850 = vsub.f32 %v1810, %v1845
    %v1851 = vsub.f32 %v1815, %v1847
    %v1852 = vmul.f32 %v1850, 1.442695
    %v1853 = vpow.pop %v1852
    %v1854 = vmul.f32 %v1851, 1.442695
    %v1855 = vpow.pop %v1854
    %1856 = vrot.lane.b32.xlu0 %v1834, 2
    %v1857 = vpop.permute.xlu0 %1856
    %1858 = vrot.lane.b32.xlu0 %v1835, 2
    %v1859 = vpop.permute.xlu0 %1858
    %v1862 = vsub.f32 %v1810, %v1857
    %v1863 = vsub.f32 %v1815, %v1859
    %v1864 = vmul.f32 %v1862, 1.442695
    %v1865 = vpow.pop %v1864
    %v1866 = vmul.f32 %v1863, 1.442695
    %v1867 = vpow.pop %v1866
    %1870 = vrot.lane.b32.xlu0 %v1853, 127
    %v1871 = vpop.permute.xlu0 %1870
    %1872 = vrot.lane.b32.xlu0 %v1855, 127
    %v1873 = vpop.permute.xlu0 %1872
    %v1876 = vadd.f32 %v1839, %v1871
    %v1877 = vadd.f32 %v1841, %v1873
    %1880 = vrot.lane.b32.xlu0 %v1865, 126
    %v1881 = vpop.permute.xlu0 %1880
    %1882 = vrot.lane.b32.xlu0 %v1867, 126
    %v1883 = vpop.permute.xlu0 %1882
    %v1886 = vadd.f32 %v1876, %v1881
    %v1887 = vadd.f32 %v1877, %v1883
    %v1888 = vrcp.pop %v1886
    %v1889 = vrcp.pop %v1887
    %1891 = vset.pattern.permute.xlu0 0
    %1892 = vperm.xlu0 %1891, %v1839
    %v1893 = vpop.permute.xlu0 %1892
    %1896 = vset.pattern.permute.xlu0 0
    %1897 = vperm.xlu0 %1896, %v1841
    %v1898 = vpop.permute.xlu0 %1897
    %v1900 = vmul.f32 %v1893, %v1722
    %v1901 = vmul.f32 %v1898, %v1723
    %1902 = vset.pattern.permute.xlu0 1
    %1903 = vperm.xlu0 %1902, %v1853
    %v1904 = vpop.permute.xlu0 %1903
    %1906 = vset.pattern.permute.xlu0 1
    %1907 = vperm.xlu0 %1906, %v1855
    %v1908 = vpop.permute.xlu0 %1907
    %v1910 = vmul.f32 %v1904, %v1722
    %v1911 = vmul.f32 %v1908, %v1723
    %1914 = vrot.lane.b32.xlu0 %v1910, 96
    %v1915 = vpop.permute.xlu0 %1914
    %1916 = vrot.lane.b32.xlu0 %v1911, 96
    %v1917 = vpop.permute.xlu0 %1916
    %v1920 = vadd.f32 %v1900, %v1915
    %v1921 = vadd.f32 %v1901, %v1917
    %1922 = vset.pattern.permute.xlu0 2
    %1923 = vperm.xlu0 %1922, %v1865
    %v1924 = vpop.permute.xlu0 %1923
    %1926 = vset.pattern.permute.xlu0 2
    %1927 = vperm.xlu0 %1926, %v1867
    %v1928 = vpop.permute.xlu0 %1927
    %v1930 = vmul.f32 %v1924, %v1722
    %v1931 = vmul.f32 %v1928, %v1723
    %1934 = vrot.lane.b32.xlu0 %v1930, 64
    %v1935 = vpop.permute.xlu0 %1934
    %1936 = vrot.lane.b32.xlu0 %v1931, 64
    %v1937 = vpop.permute.xlu0 %1936
    %v1940 = vadd.f32 %v1920, %v1935
    %v1941 = vadd.f32 %v1921, %v1937
    %1943 = vset.pattern.permute.xlu0 0
    %1944 = vperm.xlu0 %1943, %v1888
    %v1945 = vpop.permute.xlu0 %1944
    %1948 = vset.pattern.permute.xlu0 0
    %1949 = vperm.xlu0 %1948, %v1889
    %v1950 = vpop.permute.xlu0 %1949
    %v1952 = vmul.f32 %v1940, %v1945
    %v1953 = vmul.f32 %v1941, %v1950
    %vm1954 = vcmask 261120
    %1955 = vst.msk [vmem:[#allocation2] sm:$0xff] %vm1954, %v1952
    %1956 = vst.msk [vmem:[#allocation2 + $0x8] sm:$0xff] %vm1954, %v1953
    // Predicated region
    $region82: #{tpu_custom_call.1} parent=1 // pred_check
      _
    $region83: #{tpu_custom_call.1} parent=1 // pred_check_branch
      %1958 = sbr.rel (0) target = $region85
    $region84: #{tpu_custom_call.1} parent=1 // pred_region
      %s1960 = ssub.s32 256, 256
      %1961 = vsyncadd [#allocation3], %s1960
      %s1962 = sshll.u32 [#allocation2], 4
      %s1963 = int_to_ptr.vmem [resolvable:$true] %s1962
      %1968 = dma.vmem_to_hbm [thread:$0]  %s1963, 256, %s20, [#allocation3], 128, 128, 8
    $region85: #{tpu_custom_call.1} parent=1 // pred_fallthru
      _
    // Predicated region
    $region86: #{tpu_custom_call.1} parent=1 // pred_check
      _
    $region87: #{tpu_custom_call.1} parent=1 // pred_check_branch
      %1970 = sbr.rel (0) target = $region89
    $region88: #{tpu_custom_call.1} parent=1 // pred_region
      %1971 = dma.done [#allocation3], 256
    $region89: #{tpu_custom_call.1} parent=1 // pred_fallthru
      _
    %1972 = vsyncpa [#allocation3], 1

</llo_original>
